<compile_context>
chip_gen: v6e
topology: v6e:2x2x1
jax: 0.10.0
libtpu: 0.0.40
codegen_flags: <defaults>
</compile_context>

<pallas_src>
import numpy as np
import jax
import jax.numpy as jnp
from jax.experimental import pallas as pl
from jax.experimental.pallas import tpu as pltpu


_K1, _S1 = 10, 5
_K2, _S2 = 8, 4
_K3, _S3 = 4, 2
_C1P = 128          # layer-1 output channels zero-padded 64 -> 128 (lane dense)


def _conv_out_len(n, k, s):
    return (n - k) // s + 1


def _round_up8(n):
    return max(8, ((n + 7) // 8) * 8)


def _fold_batch_into_m():
    """True on single-TensorCore chips (v5e/v6e): fold B into GEMM M and run a
    single grid step.  False on multi-core chips (v5p megacore, v7x): keep a
    parallel grid over B so each core gets a batch element."""
    try:
        kind = jax.devices()[0].device_kind.lower()
    except Exception:
        return True
    return any(t in kind for t in ("v5e", "v5 lite", "v5lite",
                                   "v6e", "v6 lite", "v6lite"))


# ----------------------------------------------------------------------------
# Fused kernel builder: conv1+ReLU -> conv2+ReLU -> conv3+ReLU as 3 GEMMs for
# `nb` batch elements per kernel invocation (nb = B when batch is folded).
# ----------------------------------------------------------------------------
def _make_fused_kernel(nb, p, t3):
    np_ = t3 + 1                 # conv2 output row-pairs actually consumed
    np_pad = _round_up8(np_)     # 8-aligned row count per conv2 half (<= p)
    t3_pad = _round_up8(t3)      # 8-aligned row count per conv3 block (<= np_pad)
    m1 = nb * 8 * p              # layer-1 GEMM M

    def kernel(x_ref, w1_ref, b1_ref, w2_ref, b2_ref, w3_ref, b3_ref, o_ref):
        f32, bf16 = jnp.float32, jnp.bfloat16

        # ---- layer 1: ONE GEMM, M = nb*8*p, K = 10, N = 128 -----------------
        # Row (b, j, s, q) of x/y1 holds the layer-1 timestep 8q + 4s + j
        # (j = tap inside the stride-4 window, s = conv2 row parity).
        y1 = jnp.dot(x_ref[...], w1_ref[...], preferred_element_type=f32)
        y1 = jnp.maximum(y1 + b1_ref[...], 0.0)                    # [m1,128] f32
        # "next row" copy: y1s[i] == y1[i+1] (XLU roll, jnp.roll(-1) semantics).
        # Wrapped / cross-group rows only ever land in padding rows that are
        # never consumed (consumed conv2 pairs are q <= t3+1 <= p-1).
        y1s = pltpu.roll(y1, m1 - 1, axis=0)

        # ---- layer 2: ONE stacked GEMM, M = nb*2*np_pad, K = 1024, N = 128 --
        rows2 = []
        for b in range(nb):
            base = b * 8 * p
            ge = [y1[base + (2 * j) * p: base + (2 * j) * p + np_pad]
                  for j in range(4)]                 # a1[8q + j]      (taps 0..3)
            go = [y1[base + (2 * j + 1) * p: base + (2 * j + 1) * p + np_pad]
                  for j in range(4)]                 # a1[8q + 4 + j]  (taps 4..7)
            ges = [y1s[base + (2 * j) * p: base + (2 * j) * p + np_pad]
                   for j in range(4)]                # a1[8(q+1) + j]
            rows2.append(jnp.concatenate(ge + go, axis=1))    # even t2 = 2q
            rows2.append(jnp.concatenate(go + ges, axis=1))   # odd  t2 = 2q+1
        lhs2 = jnp.concatenate(rows2, axis=0).astype(bf16)    # [nb*2*np_pad,1024]

        a2 = jnp.dot(lhs2, w2_ref[...], preferred_element_type=f32)
        a2 = jnp.maximum(a2 + b2_ref[...], 0.0)                # [nb*2*np_pad,128]
        a2s = pltpu.roll(a2, nb * 2 * np_pad - 1, axis=0)      # a2s[i] == a2[i+1]

        # ---- layer 3: ONE stacked GEMM, M = nb*t3_pad, K = 512, N = H -------
        rows3 = []
        for b in range(nb):
            e0 = b * 2 * np_pad          # rows holding even conv2 outputs a2[2t]
            o0 = e0 + np_pad             # rows holding odd  conv2 outputs a2[2t+1]
            rows3.append(jnp.concatenate(
                [a2[e0:e0 + t3_pad],     # a2[2t]     (conv3 tap 0)
                 a2[o0:o0 + t3_pad],     # a2[2t+1]   (tap 1)
                 a2s[e0:e0 + t3_pad],    # a2[2t+2]   (tap 2)
                 a2s[o0:o0 + t3_pad]],   # a2[2t+3]   (tap 3)
                axis=1))
        lhs3 = jnp.concatenate(rows3, axis=0).astype(bf16)     # [nb*t3_pad,512]

        y3 = jnp.dot(lhs3, w3_ref[...], preferred_element_type=f32)
        y3 = jnp.maximum(y3 + b3_ref[...], 0.0)                # [nb*t3_pad,H]
        for b in range(nb):
            o_ref[b] = y3[b * t3_pad: b * t3_pad + t3]

    return kernel


# ----------------------------------------------------------------------------
# One-time parameter repack (hoisted out of the forward pass).
# ----------------------------------------------------------------------------
def pack_params(params):
    """Repack PyTorch-layout conv params into MXU-friendly, lane-dense bf16
    operands; layer-1 C_out (and layer-2 C_in) zero-padded 64 -> 128."""
    w1, b1 = params["w1"], params["b1"]          # [64,1,10],  [64]
    w2, b2 = params["w2"], params["b2"]          # [128,64,8], [128]
    w3, b3 = params["w3"], params["b3"]          # [H,128,4],  [H]
    c1, c2, h = w1.shape[0], w2.shape[0], w3.shape[0]

    w1p = jnp.transpose(w1[:, 0, :], (1, 0))                       # [K1, 64]
    w1p = jnp.pad(w1p, ((0, 0), (0, _C1P - c1))).astype(jnp.bfloat16)
    b1p = jnp.pad(b1, (0, _C1P - c1)).reshape(1, _C1P).astype(jnp.float32)

    # Single stacked conv2 matrix: row k*128 + ci  (k = tap 0..7, ci padded).
    w2p = jnp.pad(w2, ((0, 0), (0, _C1P - c1), (0, 0)))            # [C2,128,K2]
    w2p = jnp.transpose(w2p, (2, 1, 0)).reshape(_K2 * _C1P, c2)
    w2p = w2p.astype(jnp.bfloat16)                                 # [1024, C2]
    b2p = b2.reshape(1, c2).astype(jnp.float32)

    # Single stacked conv3 matrix: row k*C2 + ci  (k = tap 0..3).
    w3p = jnp.transpose(w3, (2, 1, 0)).reshape(_K3 * c2, h)
    w3p = w3p.astype(jnp.bfloat16)                                 # [512, H]
    b3p = b3.reshape(1, h).astype(jnp.float32)

    return dict(w1=w1p, b1=b1p, w2=w2p, b2=b2p, w3=w3p, b3=b3p)


def _adaptive_pool_matrix(length, target_length):
    """[target_length, length] averaging matrix with torch adaptive_avg_pool1d
    segment boundaries (floor/ceil)."""
    m = np.zeros((target_length, length), np.float32)
    for i in range(target_length):
        s = (i * length) // target_length
        e = -(-((i + 1) * length) // target_length)
        m[i, s:e] = 1.0 / (e - s)
    return jnp.asarray(m)


# ----------------------------------------------------------------------------
# Forward pass.
# ----------------------------------------------------------------------------
def dummy_wav2vec2_forward(packed, waveform, target_length=None):
    """waveform [B, L] -> features [B, T3, H] (matches the torch forward)."""
    B, L = waveform.shape
    T1 = _conv_out_len(L, _K1, _S1)
    T2 = _conv_out_len(T1, _K2, _S2)
    T3 = _conv_out_len(T2, _K3, _S3)
    assert T3 >= 1, "input too short"
    H = packed["w3"].shape[-1]

    # Padded conv2 row-pairs per batch: consumers touch pairs q = 0 .. T3+1.
    P = _round_up8(T3 + 2)

    # im2col of the waveform (static numpy index arrays), grouped by
    # (tap-in-stride-4-window j, conv2 row parity s, row-pair q) so the kernel
    # only needs sublane-aligned slices + 128-lane concats.
    jj = np.arange(4)
    ss = np.arange(2)
    qq = np.arange(P)
    t1 = 8 * qq[None, None, :] + 4 * ss[None, :, None] + jj[:, None, None]
    samp = np.minimum(t1[..., None] * _S1 + np.arange(_K1), L - 1)   # [4,2,P,K1]
    valid = (t1 < T1)[..., None]                       # zero the padding rows
    patches = jnp.where(jnp.asarray(valid), waveform[:, samp], 0.0)
    patches = patches.reshape(B, 8 * P, _K1).astype(jnp.bfloat16)
    patches = patches.reshape(B * 8 * P, _K1)
    # NOTE: padded rows (t1 >= T1) become ReLU(b1) after layer 1; they only
    # ever feed the padded (> T3+1) rows of the stacked GEMMs, never a real
    # output row.

    nb = B if _fold_batch_into_m() else 1              # batch elems per grid step
    kernel = _make_fused_kernel(nb, P, T3)

    out = pl.pallas_call(
        kernel,
        out_shape=jax.ShapeDtypeStruct((B, T3, H), jnp.float32),
        grid=(B // nb,),
        in_specs=[
            pl.BlockSpec((nb * 8 * P, _K1), lambda i: (i, 0)),
            pl.BlockSpec(packed["w1"].shape, lambda i: (0, 0)),
            pl.BlockSpec(packed["b1"].shape, lambda i: (0, 0)),
            pl.BlockSpec(packed["w2"].shape, lambda i: (0, 0)),
            pl.BlockSpec(packed["b2"].shape, lambda i: (0, 0)),
            pl.BlockSpec(packed["w3"].shape, lambda i: (0, 0)),
            pl.BlockSpec(packed["b3"].shape, lambda i: (0, 0)),
        ],
        out_specs=pl.BlockSpec((nb, T3, H), lambda i: (i, 0, 0)),
        compiler_params=pltpu.CompilerParams(
            dimension_semantics=("parallel",)),
    )(patches, packed["w1"], packed["b1"], packed["w2"], packed["b2"],
      packed["w3"], packed["b3"])

    if target_length is not None and out.shape[1] != target_length:
        # adaptive_avg_pool1d as ONE plain-JAX matmul against a precomputed
        # averaging matrix (could be folded into the kernel as a 4th dot).
        pool = _adaptive_pool_matrix(out.shape[1], target_length)
        out = jnp.einsum("ot,btc->boc", pool, out)
    return out


# ----------------------------------------------------------------------------
# Deterministic PyTorch-style parameter init + pure-JAX reference.
# ----------------------------------------------------------------------------
def init_params(key, hidden_size):
    ks = jax.random.split(key, 6)

    def conv_init(kw, kb, c_out, c_in, k):
        bound = 1.0 / np.sqrt(c_in * k)
        w = jax.random.uniform(kw, (c_out, c_in, k), jnp.float32, -bound, bound)
        b = jax.random.uniform(kb, (c_out,), jnp.float32, -bound, bound)
        return w, b

    w1, b1 = conv_init(ks[0], ks[1], 64, 1, 10)
    w2, b2 = conv_init(ks[2], ks[3], 128, 64, 8)
    w3, b3 = conv_init(ks[4], ks[5], hidden_size, 128, 4)
    return dict(w1=w1, b1=b1, w2=w2, b2=b2, w3=w3, b3=b3)


def _ref_forward(params, waveform):
    x = waveform[:, None, :]
    for w, b, s in ((params["w1"], params["b1"], 5),
                    (params["w2"], params["b2"], 4),
                    (params["w3"], params["b3"], 2)):
        x = jax.lax.conv_general_dilated(
            x, w, window_strides=(s,), padding="VALID",
            dimension_numbers=("NCH", "OIH", "NCH"),
            precision=jax.lax.Precision.HIGHEST)
        x = jax.nn.relu(x + b[None, :, None])
    return jnp.transpose(x, (0, 2, 1))


if __name__ == "__main__":
    hidden_size = 256
    B, L = 2, 400                       # -> T1=79, T2=18, T3=8

    key = jax.random.PRNGKey(0)
    kp, kx = jax.random.split(key)
    params = init_params(kp, hidden_size)
    packed = pack_params(params)        # one-time weight repack / pad / bf16
    waveform = jax.random.normal(kx, (B, L), jnp.float32)

    fwd = jax.jit(dummy_wav2vec2_forward, static_argnames=("target_length",))

    out = jax.block_until_ready(fwd(packed, waveform, target_length=None))
    assert out.shape == (B, 8, hidden_size), out.shape

    ref = jax.block_until_ready(_ref_forward(params, waveform))
    # bf16 MXU operands with f32 accumulation vs f32 torch reference.
    np.testing.assert_allclose(np.asarray(out), np.asarray(ref),
                               atol=5e-2, rtol=5e-2)

    # adaptive-pool (resize) path: single averaging-matrix matmul.
    pooled = jax.block_until_ready(fwd(packed, waveform, target_length=4))
    assert pooled.shape == (B, 4, hidden_size), pooled.shape
    ref_np = np.asarray(ref)
    ref_pool = np.stack(
        [ref_np[:, (i * 8) // 4: -(-((i + 1) * 8) // 4), :].mean(axis=1)
         for i in range(4)], axis=1)
    np.testing.assert_allclose(np.asarray(pooled), ref_pool,
                               atol=5e-2, rtol=5e-2)

    print("KERNEL_OK")
</pallas_src>

<mosaic_0001>
module attributes {stable_mosaic.version = 11 : i64} {
  func.func @kernel(%arg0: i32, %arg1: memref<128x10xbf16, #tpu.memory_space<vmem>>, %arg2: memref<10x128xbf16, #tpu.memory_space<vmem>>, %arg3: memref<1x128xf32, #tpu.memory_space<vmem>>, %arg4: memref<1024x128xbf16, #tpu.memory_space<vmem>>, %arg5: memref<1x128xf32, #tpu.memory_space<vmem>>, %arg6: memref<512x256xbf16, #tpu.memory_space<vmem>>, %arg7: memref<1x256xf32, #tpu.memory_space<vmem>>, %arg8: memref<1x8x256xf32, #tpu.memory_space<vmem>>) attributes {dimension_semantics = [#tpu.dimension_semantics<parallel>], iteration_bounds = array<i64: 2>, scalar_prefetch = 0 : i64, scratch_operands = 0 : i64, tpu.core_type = #tpu.core_type<tc>, window_params = [{transform_indices = @transform_0, window_bounds = array<i64: 128, 10>}, {pipeline_mode = #tpu.pipeline_mode<synchronous>, transform_indices = @transform_1, window_bounds = array<i64: 10, 128>}, {pipeline_mode = #tpu.pipeline_mode<synchronous>, transform_indices = @transform_2, window_bounds = array<i64: 1, 128>}, {pipeline_mode = #tpu.pipeline_mode<synchronous>, transform_indices = @transform_3, window_bounds = array<i64: 1024, 128>}, {pipeline_mode = #tpu.pipeline_mode<synchronous>, transform_indices = @transform_4, window_bounds = array<i64: 1, 128>}, {pipeline_mode = #tpu.pipeline_mode<synchronous>, transform_indices = @transform_5, window_bounds = array<i64: 512, 256>}, {pipeline_mode = #tpu.pipeline_mode<synchronous>, transform_indices = @transform_6, window_bounds = array<i64: 1, 256>}, {transform_indices = @transform_7, window_bounds = array<i64: 1, 8, 256>}]} {
    %c0 = arith.constant 0 : index
    %c0_0 = arith.constant 0 : index
    %0 = vector.load %arg1[%c0, %c0_0] : memref<128x10xbf16, #tpu.memory_space<vmem>>, vector<128x10xbf16>
    %c0_1 = arith.constant 0 : index
    %c0_2 = arith.constant 0 : index
    %1 = vector.load %arg2[%c0_1, %c0_2] : memref<10x128xbf16, #tpu.memory_space<vmem>>, vector<10x128xbf16>
    %cst = arith.constant dense<0.000000e+00> : vector<128x128xf32>
    %2 = tpu.matmul %0, %1, %cst {dimension_numbers = #tpu.dot_dimension_numbers<[1], [0], [0], [1], [0, 0, 1, 1], [], []>} : vector<128x10xbf16>, vector<10x128xbf16>, vector<128x128xf32> -> vector<128x128xf32>
    %c0_3 = arith.constant 0 : index
    %c0_4 = arith.constant 0 : index
    %3 = vector.load %arg3[%c0_3, %c0_4] : memref<1x128xf32, #tpu.memory_space<vmem>>, vector<1x128xf32>
    %4 = vector.broadcast %3 : vector<1x128xf32> to vector<128x128xf32>
    %5 = arith.addf %2, %4 : vector<128x128xf32>
    %cst_5 = arith.constant 0.000000e+00 : f32
    %6 = vector.broadcast %cst_5 : f32 to vector<128x128xf32>
    %7 = arith.maximumf %5, %6 : vector<128x128xf32>
    %c127_i32 = arith.constant 127 : i32
    %8 = tpu.dynamic_rotate %7 by %c127_i32 dim 0 : vector<128x128xf32>, i32 -> vector<128x128xf32>
    %9 = vector.extract_strided_slice %7 {offsets = [0, 0], sizes = [16, 128], strides = [1, 1]} : vector<128x128xf32> to vector<16x128xf32>
    %10 = vector.extract_strided_slice %7 {offsets = [32, 0], sizes = [16, 128], strides = [1, 1]} : vector<128x128xf32> to vector<16x128xf32>
    %11 = vector.extract_strided_slice %7 {offsets = [64, 0], sizes = [16, 128], strides = [1, 1]} : vector<128x128xf32> to vector<16x128xf32>
    %12 = vector.extract_strided_slice %7 {offsets = [96, 0], sizes = [16, 128], strides = [1, 1]} : vector<128x128xf32> to vector<16x128xf32>
    %13 = vector.extract_strided_slice %7 {offsets = [16, 0], sizes = [16, 128], strides = [1, 1]} : vector<128x128xf32> to vector<16x128xf32>
    %14 = vector.extract_strided_slice %7 {offsets = [48, 0], sizes = [16, 128], strides = [1, 1]} : vector<128x128xf32> to vector<16x128xf32>
    %15 = vector.extract_strided_slice %7 {offsets = [80, 0], sizes = [16, 128], strides = [1, 1]} : vector<128x128xf32> to vector<16x128xf32>
    %16 = vector.extract_strided_slice %7 {offsets = [112, 0], sizes = [16, 128], strides = [1, 1]} : vector<128x128xf32> to vector<16x128xf32>
    %17 = vector.extract_strided_slice %8 {offsets = [0, 0], sizes = [16, 128], strides = [1, 1]} : vector<128x128xf32> to vector<16x128xf32>
    %18 = vector.extract_strided_slice %8 {offsets = [32, 0], sizes = [16, 128], strides = [1, 1]} : vector<128x128xf32> to vector<16x128xf32>
    %19 = vector.extract_strided_slice %8 {offsets = [64, 0], sizes = [16, 128], strides = [1, 1]} : vector<128x128xf32> to vector<16x128xf32>
    %20 = vector.extract_strided_slice %8 {offsets = [96, 0], sizes = [16, 128], strides = [1, 1]} : vector<128x128xf32> to vector<16x128xf32>
    %21 = tpu.concatenate %9, %10, %11, %12, %13, %14, %15, %16 in 1 : vector<16x128xf32>, vector<16x128xf32>, vector<16x128xf32>, vector<16x128xf32>, vector<16x128xf32>, vector<16x128xf32>, vector<16x128xf32>, vector<16x128xf32> -> vector<16x1024xf32>
    %22 = tpu.concatenate %13, %14, %15, %16, %17, %18, %19, %20 in 1 : vector<16x128xf32>, vector<16x128xf32>, vector<16x128xf32>, vector<16x128xf32>, vector<16x128xf32>, vector<16x128xf32>, vector<16x128xf32>, vector<16x128xf32> -> vector<16x1024xf32>
    %23 = tpu.concatenate %21, %22 in 0 : vector<16x1024xf32>, vector<16x1024xf32> -> vector<32x1024xf32>
    %24 = arith.truncf %23 : vector<32x1024xf32> to vector<32x1024xbf16>
    %c0_6 = arith.constant 0 : index
    %c0_7 = arith.constant 0 : index
    %25 = vector.load %arg4[%c0_6, %c0_7] : memref<1024x128xbf16, #tpu.memory_space<vmem>>, vector<1024x128xbf16>
    %cst_8 = arith.constant dense<0.000000e+00> : vector<32x128xf32>
    %26 = tpu.matmul %24, %25, %cst_8 {dimension_numbers = #tpu.dot_dimension_numbers<[1], [0], [0], [1], [0, 0, 1, 1], [], []>} : vector<32x1024xbf16>, vector<1024x128xbf16>, vector<32x128xf32> -> vector<32x128xf32>
    %c0_9 = arith.constant 0 : index
    %c0_10 = arith.constant 0 : index
    %27 = vector.load %arg5[%c0_9, %c0_10] : memref<1x128xf32, #tpu.memory_space<vmem>>, vector<1x128xf32>
    %28 = vector.broadcast %27 : vector<1x128xf32> to vector<32x128xf32>
    %29 = arith.addf %26, %28 : vector<32x128xf32>
    %cst_11 = arith.constant 0.000000e+00 : f32
    %30 = vector.broadcast %cst_11 : f32 to vector<32x128xf32>
    %31 = arith.maximumf %29, %30 : vector<32x128xf32>
    %c31_i32 = arith.constant 31 : i32
    %32 = tpu.dynamic_rotate %31 by %c31_i32 dim 0 : vector<32x128xf32>, i32 -> vector<32x128xf32>
    %33 = vector.extract_strided_slice %31 {offsets = [0, 0], sizes = [8, 128], strides = [1, 1]} : vector<32x128xf32> to vector<8x128xf32>
    %34 = vector.extract_strided_slice %31 {offsets = [16, 0], sizes = [8, 128], strides = [1, 1]} : vector<32x128xf32> to vector<8x128xf32>
    %35 = vector.extract_strided_slice %32 {offsets = [0, 0], sizes = [8, 128], strides = [1, 1]} : vector<32x128xf32> to vector<8x128xf32>
    %36 = vector.extract_strided_slice %32 {offsets = [16, 0], sizes = [8, 128], strides = [1, 1]} : vector<32x128xf32> to vector<8x128xf32>
    %37 = tpu.concatenate %33, %34, %35, %36 in 1 : vector<8x128xf32>, vector<8x128xf32>, vector<8x128xf32>, vector<8x128xf32> -> vector<8x512xf32>
    %38 = arith.truncf %37 : vector<8x512xf32> to vector<8x512xbf16>
    %c0_12 = arith.constant 0 : index
    %c0_13 = arith.constant 0 : index
    %39 = vector.load %arg6[%c0_12, %c0_13] : memref<512x256xbf16, #tpu.memory_space<vmem>>, vector<512x256xbf16>
    %cst_14 = arith.constant dense<0.000000e+00> : vector<8x256xf32>
    %40 = tpu.matmul %38, %39, %cst_14 {dimension_numbers = #tpu.dot_dimension_numbers<[1], [0], [0], [1], [0, 0, 1, 1], [], []>} : vector<8x512xbf16>, vector<512x256xbf16>, vector<8x256xf32> -> vector<8x256xf32>
    %c0_15 = arith.constant 0 : index
    %c0_16 = arith.constant 0 : index
    %41 = vector.load %arg7[%c0_15, %c0_16] : memref<1x256xf32, #tpu.memory_space<vmem>>, vector<1x256xf32>
    %42 = vector.broadcast %41 : vector<1x256xf32> to vector<8x256xf32>
    %43 = arith.addf %40, %42 : vector<8x256xf32>
    %cst_17 = arith.constant 0.000000e+00 : f32
    %44 = vector.broadcast %cst_17 : f32 to vector<8x256xf32>
    %45 = arith.maximumf %43, %44 : vector<8x256xf32>
    %c0_18 = arith.constant 0 : index
    %c0_19 = arith.constant 0 : index
    %c0_20 = arith.constant 0 : index
    %46 = vector.load %arg8[%c0_18, %c0_19, %c0_20] : memref<1x8x256xf32, #tpu.memory_space<vmem>>, vector<1x8x256xf32>
    %47 = vector.shape_cast %46 : vector<1x8x256xf32> to vector<8x256xf32>
    %48 = vector.shape_cast %45 : vector<8x256xf32> to vector<1x8x256xf32>
    tpu.vector_store %arg8[%c0_18, %c0_19, %c0_20], %48 {strides = array<i32>} : memref<1x8x256xf32, #tpu.memory_space<vmem>>, vector<1x8x256xf32>,
    return
  }
  func.func @transform_0(%arg0: i32) -> (i32, i32) {
    %c0_i32 = arith.constant 0 : i32
    %c0_i32_0 = arith.constant 0 : i32
    return %arg0, %c0_i32 : i32, i32
  }
  func.func @transform_1(%arg0: i32) -> (i32, i32) {
    %c0_i32 = arith.constant 0 : i32
    %c0_i32_0 = arith.constant 0 : i32
    %c0_i32_1 = arith.constant 0 : i32
    return %c0_i32, %c0_i32_0 : i32, i32
  }
  func.func @transform_2(%arg0: i32) -> (i32, i32) {
    %c0_i32 = arith.constant 0 : i32
    %c0_i32_0 = arith.constant 0 : i32
    %c0_i32_1 = arith.constant 0 : i32
    return %c0_i32, %c0_i32_0 : i32, i32
  }
  func.func @transform_3(%arg0: i32) -> (i32, i32) {
    %c0_i32 = arith.constant 0 : i32
    %c0_i32_0 = arith.constant 0 : i32
    %c0_i32_1 = arith.constant 0 : i32
    return %c0_i32, %c0_i32_0 : i32, i32
  }
  func.func @transform_4(%arg0: i32) -> (i32, i32) {
    %c0_i32 = arith.constant 0 : i32
    %c0_i32_0 = arith.constant 0 : i32
    %c0_i32_1 = arith.constant 0 : i32
    return %c0_i32, %c0_i32_0 : i32, i32
  }
  func.func @transform_5(%arg0: i32) -> (i32, i32) {
    %c0_i32 = arith.constant 0 : i32
    %c0_i32_0 = arith.constant 0 : i32
    %c0_i32_1 = arith.constant 0 : i32
    return %c0_i32, %c0_i32_0 : i32, i32
  }
  func.func @transform_6(%arg0: i32) -> (i32, i32) {
    %c0_i32 = arith.constant 0 : i32
    %c0_i32_0 = arith.constant 0 : i32
    %c0_i32_1 = arith.constant 0 : i32
    return %c0_i32, %c0_i32_0 : i32, i32
  }
  func.func @transform_7(%arg0: i32) -> (i32, i32, i32) {
    %c0_i32 = arith.constant 0 : i32
    %c0_i32_0 = arith.constant 0 : i32
    %c0_i32_1 = arith.constant 0 : i32
    return %arg0, %c0_i32, %c0_i32_0 : i32, i32, i32
  }
}

</mosaic_0001>

<llo_original>
// kernel: dummy_wav2vec2_forward.1
$region0: #{dummy_wav2vec2_forward.1}
  #allocation0 [shape = 'u32[]', space=smem, size = 0x4, offset = 0x4, fixed_abs, tag = 'smem constant byte address 0x4 - core index']
  #allocation1 [shape = 'u32[144,128]{1,0:T(1,128)}', space=vmem, size = 0x12000, scoped, tag = 'internal scratch']
  %s0 = inlined_call_operand.vmem [shape: bf16[256,10], index: 0, kind: input, shape index: {}]
  %s1 = inlined_call_operand.vmem [shape: bf16[10,128], index: 1, kind: input, shape index: {}]
  %s2 = inlined_call_operand.vmem [shape: f32[1,128], index: 2, kind: input, shape index: {}]
  %s3 = inlined_call_operand.vmem [shape: bf16[1024,128], index: 3, kind: input, shape index: {}]
  %s4 = inlined_call_operand.vmem [shape: f32[1,128], index: 4, kind: input, shape index: {}]
  %s5 = inlined_call_operand.vmem [shape: bf16[512,256], index: 5, kind: input, shape index: {}]
  %s6 = inlined_call_operand.vmem [shape: f32[1,256], index: 6, kind: input, shape index: {}]
  %s7 = inlined_call_operand.hbm [shape: f32[2,8,256], index: 7, kind: output, shape index: {}]
  %s8 = sld [smem:[#allocation0]]
  $region61: #{dummy_wav2vec2_forward.1} parent=0
    _
  %s10 = ssub.s32 1, %s8
  %s11 = scalar_select 0, %s10, %s8
  $region1: #{dummy_wav2vec2_forward.1} parent=0
    #allocation2 [shape = 'u8[16384]{0}', space=vmem, size = 0x4000, scoped, tag = 'output window, operand 0']
    #allocation3 [shape = 's32[2]{0}', space=sflag, size = 0x8, scoped, tag = 'scoped memory for dummy_wav2vec2_forward.1']
    %12 = vsyncpa [#allocation3], 0
    %s13 = scalar_lea.sflag [#allocation3], 1
    %14 = vsyncpa %s13, 0
    loop: start=0, step=1, limit=4
    $region2: #{dummy_wav2vec2_forward.1} parent=1 // loop_pre_header
      _
    $region3: #{dummy_wav2vec2_forward.1} parent=1 // loop_header
      %s16 = sphi 0, %s20
      %p17 = scmp.ge.s32.totalorder %s16, 4
      %s26 = sphi 0, %s28
      %s29 = sphi 0, %s26
      %s30 = sphi 0, %s29
      %s46 = sphi 0, %s30
      %s50 = sphi 0, %s50
      %s52 = sphi 0, %s50
      %s53 = sphi 0, %s52
      %s67 = sphi 0, %s53
      %s71 = sphi 0, %s71
      %s73 = sphi 0, %s71
      %s74 = sphi 0, %s73
      %s88 = sphi 0, %s74
      %s92 = sphi 0, %s92
      %s94 = sphi 0, %s92
      %s95 = sphi 0, %s94
      %s109 = sphi 0, %s95
      %s113 = sphi 0, %s113
      %s115 = sphi 0, %s113
      %s116 = sphi 0, %s115
      %s130 = sphi 0, %s116
      %s134 = sphi 0, %s134
      %s136 = sphi 0, %s134
      %s137 = sphi 0, %s136
      %s151 = sphi 0, %s137
      %s155 = sphi 0, %s155
      %s157 = sphi 0, %s155
      %s158 = sphi 0, %s157
      %s172 = sphi 0, %s158
      %s178 = sphi 0, %s180
      %s181 = sphi 0, %s178
      %s182 = sphi 0, %s181
      %s198 = sphi 0, %s182
    $region4: #{dummy_wav2vec2_forward.1} parent=1 // loop_header_branch
      %19 = sbr.rel (%p17) target = $region8
    $region5: #{dummy_wav2vec2_forward.1} parent=1 // loop_body
      %s21 = ssub.s32 %s16, 1
      %s22 = ssub.s32 %s16, 2
      %s23 = sadd.s32 %s16, 1
      %s24 = ssub.s32 %s16, %s23
      %p25 = scmp.eq.s32.totalorder %s24, 0
      %s27 = sadd.s32 %s26, 1
      %s28 = scalar_select %p25, %s26, %s27
      %p31 = pneg %p25
      %p32 = scmp.eq.s32.totalorder %s16, 1
      %p33 = por %p31, %p32
      %p34 = scmp.ne.s32.totalorder %s26, %s29
      %p35 = scmp.eq.s32.totalorder %s16, 0
      %p36 = por %p34, %p35
      %p37 = scmp.ne.s32.totalorder %s26, %s29
      %p38 = scmp.eq.s32.totalorder %s21, 1
      %p39 = por %p37, %p38
      %p40 = scmp.ne.s32.totalorder %s29, %s30
      %p41 = scmp.eq.s32.totalorder %s21, 0
      %p42 = por %p40, %p41
      %p43 = scmp.ne.s32.totalorder %s29, %s30
      %p44 = scmp.eq.s32.totalorder %s22, 1
      %p45 = por %p43, %p44
      %p47 = scmp.ne.s32.totalorder %s30, %s46
      %p48 = scmp.eq.s32.totalorder %s22, 0
      %p49 = por %p47, %p48
      %s51 = sadd.s32 %s50, 1
      %p54 = scmp.eq.s32.totalorder %s16, 1
      %p55 = scmp.ne.s32.totalorder %s50, %s52
      %p56 = scmp.eq.s32.totalorder %s16, 0
      %p57 = por %p55, %p56
      %p58 = scmp.ne.s32.totalorder %s50, %s52
      %p59 = scmp.eq.s32.totalorder %s21, 1
      %p60 = por %p58, %p59
      %p61 = scmp.ne.s32.totalorder %s52, %s53
      %p62 = scmp.eq.s32.totalorder %s21, 0
      %p63 = por %p61, %p62
      %p64 = scmp.ne.s32.totalorder %s52, %s53
      %p65 = scmp.eq.s32.totalorder %s22, 1
      %p66 = por %p64, %p65
      %p68 = scmp.ne.s32.totalorder %s53, %s67
      %p69 = scmp.eq.s32.totalorder %s22, 0
      %p70 = por %p68, %p69
      %s72 = sadd.s32 %s71, 1
      %p75 = scmp.eq.s32.totalorder %s16, 1
      %p76 = scmp.ne.s32.totalorder %s71, %s73
      %p77 = scmp.eq.s32.totalorder %s16, 0
      %p78 = por %p76, %p77
      %p79 = scmp.ne.s32.totalorder %s71, %s73
      %p80 = scmp.eq.s32.totalorder %s21, 1
      %p81 = por %p79, %p80
      %p82 = scmp.ne.s32.totalorder %s73, %s74
      %p83 = scmp.eq.s32.totalorder %s21, 0
      %p84 = por %p82, %p83
      %p85 = scmp.ne.s32.totalorder %s73, %s74
      %p86 = scmp.eq.s32.totalorder %s22, 1
      %p87 = por %p85, %p86
      %p89 = scmp.ne.s32.totalorder %s74, %s88
      %p90 = scmp.eq.s32.totalorder %s22, 0
      %p91 = por %p89, %p90
      %s93 = sadd.s32 %s92, 1
      %p96 = scmp.eq.s32.totalorder %s16, 1
      %p97 = scmp.ne.s32.totalorder %s92, %s94
      %p98 = scmp.eq.s32.totalorder %s16, 0
      %p99 = por %p97, %p98
      %p100 = scmp.ne.s32.totalorder %s92, %s94
      %p101 = scmp.eq.s32.totalorder %s21, 1
      %p102 = por %p100, %p101
      %p103 = scmp.ne.s32.totalorder %s94, %s95
      %p104 = scmp.eq.s32.totalorder %s21, 0
      %p105 = por %p103, %p104
      %p106 = scmp.ne.s32.totalorder %s94, %s95
      %p107 = scmp.eq.s32.totalorder %s22, 1
      %p108 = por %p106, %p107
      %p110 = scmp.ne.s32.totalorder %s95, %s109
      %p111 = scmp.eq.s32.totalorder %s22, 0
      %p112 = por %p110, %p111
      %s114 = sadd.s32 %s113, 1
      %p117 = scmp.eq.s32.totalorder %s16, 1
      %p118 = scmp.ne.s32.totalorder %s113, %s115
      %p119 = scmp.eq.s32.totalorder %s16, 0
      %p120 = por %p118, %p119
      %p121 = scmp.ne.s32.totalorder %s113, %s115
      %p122 = scmp.eq.s32.totalorder %s21, 1
      %p123 = por %p121, %p122
      %p124 = scmp.ne.s32.totalorder %s115, %s116
      %p125 = scmp.eq.s32.totalorder %s21, 0
      %p126 = por %p124, %p125
      %p127 = scmp.ne.s32.totalorder %s115, %s116
      %p128 = scmp.eq.s32.totalorder %s22, 1
      %p129 = por %p127, %p128
      %p131 = scmp.ne.s32.totalorder %s116, %s130
      %p132 = scmp.eq.s32.totalorder %s22, 0
      %p133 = por %p131, %p132
      %s135 = sadd.s32 %s134, 1
      %p138 = scmp.eq.s32.totalorder %s16, 1
      %p139 = scmp.ne.s32.totalorder %s134, %s136
      %p140 = scmp.eq.s32.totalorder %s16, 0
      %p141 = por %p139, %p140
      %p142 = scmp.ne.s32.totalorder %s134, %s136
      %p143 = scmp.eq.s32.totalorder %s21, 1
      %p144 = por %p142, %p143
      %p145 = scmp.ne.s32.totalorder %s136, %s137
      %p146 = scmp.eq.s32.totalorder %s21, 0
      %p147 = por %p145, %p146
      %p148 = scmp.ne.s32.totalorder %s136, %s137
      %p149 = scmp.eq.s32.totalorder %s22, 1
      %p150 = por %p148, %p149
      %p152 = scmp.ne.s32.totalorder %s137, %s151
      %p153 = scmp.eq.s32.totalorder %s22, 0
      %p154 = por %p152, %p153
      %s156 = sadd.s32 %s155, 1
      %p159 = scmp.eq.s32.totalorder %s16, 1
      %p160 = scmp.ne.s32.totalorder %s155, %s157
      %p161 = scmp.eq.s32.totalorder %s16, 0
      %p162 = por %p160, %p161
      %p163 = scmp.ne.s32.totalorder %s155, %s157
      %p164 = scmp.eq.s32.totalorder %s21, 1
      %p165 = por %p163, %p164
      %p166 = scmp.ne.s32.totalorder %s157, %s158
      %p167 = scmp.eq.s32.totalorder %s21, 0
      %p168 = por %p166, %p167
      %p169 = scmp.ne.s32.totalorder %s157, %s158
      %p170 = scmp.eq.s32.totalorder %s22, 1
      %p171 = por %p169, %p170
      %p173 = scmp.ne.s32.totalorder %s158, %s172
      %p174 = scmp.eq.s32.totalorder %s22, 0
      %p175 = por %p173, %p174
      %s176 = ssub.s32 %s16, %s23
      %p177 = scmp.eq.s32.totalorder %s176, 0
      %s179 = sadd.s32 %s178, 1
      %s180 = scalar_select %p177, %s178, %s179
      %p183 = pneg %p177
      %p184 = scmp.eq.s32.totalorder %s16, 1
      %p185 = por %p183, %p184
      %p186 = scmp.ne.s32.totalorder %s178, %s181
      %p187 = scmp.eq.s32.totalorder %s16, 0
      %p188 = por %p186, %p187
      %p189 = scmp.ne.s32.totalorder %s178, %s181
      %p190 = scmp.eq.s32.totalorder %s21, 1
      %p191 = por %p189, %p190
      %p192 = scmp.ne.s32.totalorder %s181, %s182
      %p193 = scmp.eq.s32.totalorder %s21, 0
      %p194 = por %p192, %p193
      %p195 = scmp.ne.s32.totalorder %s181, %s182
      %p196 = scmp.eq.s32.totalorder %s22, 1
      %p197 = por %p195, %p196
      %p199 = scmp.ne.s32.totalorder %s182, %s198
      %p200 = scmp.eq.s32.totalorder %s22, 0
      %p201 = por %p199, %p200
      %p202 = scmp.le.s32.totalorder 1, %s16
      %p203 = scmp.lt.s32.totalorder %s16, 3
      %p204 = pnand %p202, %p203
      %p205 = pneg %p204
      // Predicated region
      $region9: #{dummy_wav2vec2_forward.1} parent=5 // pred_check
        _
      $region10: #{dummy_wav2vec2_forward.1} parent=5 // pred_check_branch
        %207 = sbr.rel (%p204) target = $region12
      $region11: #{dummy_wav2vec2_forward.1} parent=5 // pred_region
        %s208 = ssub.s32 %s16, 1
        // Predicated region
        $region13: #{dummy_wav2vec2_forward.1} parent=11 // pred_check
          %p209 = pneg %p63
        $region14: #{dummy_wav2vec2_forward.1} parent=11 // pred_check_branch
          %211 = sbr.rel (%p209) target = $region16
        $region15: #{dummy_wav2vec2_forward.1} parent=11 // pred_region
          _
        $region16: #{dummy_wav2vec2_forward.1} parent=11 // pred_fallthru
          _
        // Predicated region
        $region17: #{dummy_wav2vec2_forward.1} parent=11 // pred_check
          %p212 = pneg %p84
        $region18: #{dummy_wav2vec2_forward.1} parent=11 // pred_check_branch
          %214 = sbr.rel (%p212) target = $region20
        $region19: #{dummy_wav2vec2_forward.1} parent=11 // pred_region
          _
        $region20: #{dummy_wav2vec2_forward.1} parent=11 // pred_fallthru
          _
        // Predicated region
        $region21: #{dummy_wav2vec2_forward.1} parent=11 // pred_check
          %p215 = pneg %p105
        $region22: #{dummy_wav2vec2_forward.1} parent=11 // pred_check_branch
          %217 = sbr.rel (%p215) target = $region24
        $region23: #{dummy_wav2vec2_forward.1} parent=11 // pred_region
          _
        $region24: #{dummy_wav2vec2_forward.1} parent=11 // pred_fallthru
          _
        // Predicated region
        $region25: #{dummy_wav2vec2_forward.1} parent=11 // pred_check
          %p218 = pneg %p126
        $region26: #{dummy_wav2vec2_forward.1} parent=11 // pred_check_branch
          %220 = sbr.rel (%p218) target = $region28
        $region27: #{dummy_wav2vec2_forward.1} parent=11 // pred_region
          _
        $region28: #{dummy_wav2vec2_forward.1} parent=11 // pred_fallthru
          _
        // Predicated region
        $region29: #{dummy_wav2vec2_forward.1} parent=11 // pred_check
          %p221 = pneg %p147
        $region30: #{dummy_wav2vec2_forward.1} parent=11 // pred_check_branch
          %223 = sbr.rel (%p221) target = $region32
        $region31: #{dummy_wav2vec2_forward.1} parent=11 // pred_region
          _
        $region32: #{dummy_wav2vec2_forward.1} parent=11 // pred_fallthru
          _
        // Predicated region
        $region33: #{dummy_wav2vec2_forward.1} parent=11 // pred_check
          %p224 = pneg %p168
        $region34: #{dummy_wav2vec2_forward.1} parent=11 // pred_check_branch
          %226 = sbr.rel (%p224) target = $region36
        $region35: #{dummy_wav2vec2_forward.1} parent=11 // pred_region
          _
        $region36: #{dummy_wav2vec2_forward.1} parent=11 // pred_fallthru
          _
      $region12: #{dummy_wav2vec2_forward.1} parent=5 // pred_fallthru
        _
      %p227 = scmp.lt.s32.totalorder %s16, 2
      // Predicated region
      $region37: #{dummy_wav2vec2_forward.1} parent=5 // pred_check
        %p228 = pneg %p227
      $region38: #{dummy_wav2vec2_forward.1} parent=5 // pred_check_branch
        %230 = sbr.rel (%p228) target = $region40
      $region39: #{dummy_wav2vec2_forward.1} parent=5 // pred_region
        // Predicated region
        $region41: #{dummy_wav2vec2_forward.1} parent=39 // pred_check
          %p231 = pneg %p36
        $region42: #{dummy_wav2vec2_forward.1} parent=39 // pred_check_branch
          %233 = sbr.rel (%p231) target = $region44
        $region43: #{dummy_wav2vec2_forward.1} parent=39 // pred_region
          %s234 = smul.u32 16, %s16
          %p235 = scmp.lt.s32.totalorder %s234, 31
          %s236 = scalar_select %p235, %s234, 31
          %s237 = smul.addr %s236, 4
          %s238 = scalar_lea.vmem %s0, %s237
          %s239 = smul.u32 16, %s16
        $region44: #{dummy_wav2vec2_forward.1} parent=39 // pred_fallthru
          _
      $region40: #{dummy_wav2vec2_forward.1} parent=5 // pred_fallthru
        _
      %p240 = scmp.le.s32.totalorder 1, %s16
      %p241 = scmp.lt.s32.totalorder %s16, 3
      %p242 = pnand %p240, %p241
      %p243 = pneg %p242
      // Predicated region
      $region45: #{dummy_wav2vec2_forward.1} parent=5 // pred_check
        _
      $region46: #{dummy_wav2vec2_forward.1} parent=5 // pred_check_branch
        %245 = sbr.rel (%p242) target = $region48
      $region47: #{dummy_wav2vec2_forward.1} parent=5 // pred_region
        %s246 = ssub.s32 %s16, 1
        %s247 = smul.u32 16, %s21
        %p248 = scmp.lt.s32.totalorder %s247, 31
        %s249 = scalar_select %p248, %s247, 31
        %s250 = smul.addr %s249, 4
        %s251 = scalar_lea.vmem %s0, %s250
        %p252 = pneg %p42
        %p253 = pneg %p39
        %p254 = pneg %p63
        %p255 = pneg %p60
        %p256 = pneg %p84
        %p257 = pneg %p81
        %p258 = pneg %p105
        %p259 = pneg %p102
        %p260 = pneg %p126
        %p261 = pneg %p123
        %p262 = pneg %p147
        %p263 = pneg %p144
        %p264 = pneg %p168
        %p265 = pneg %p165
        %p266 = pneg %p194
        %p267 = pneg %p191
        %s268 = sand.u32 %s181, 1
        %s269 = scalar_lea.sflag [#allocation3], %s268
        %s270 = sand.u32 %s181, 1
        %s271 = smul.addr %s270, 16
        %s272 = scalar_lea.vmem [#allocation2], %s271
        %s273 = smul.u32 16, %s21
        %p274 = scmp.lt.s32.totalorder %s273, 31
        %s275 = scalar_select %p274, %s273, 31
        %s276 = smul.addr %s275, 4
        %s277 = scalar_lea.vmem %s0, %s276
        %s278 = smul.u32 16, %s21
        %v280 = vld [vmem:[%s277] sm:$0xf]
        %v281 = vld [vmem:[%s277 + $0x4] sm:$0xf]
        %v282 = vld [vmem:[%s277 + $0x8] sm:$0xf]
        %v283 = vld [vmem:[%s277 + $0xc] sm:$0xf]
        %v284 = vld [vmem:[%s277 + $0x10] sm:$0xf]
        %v285 = vld [vmem:[%s277 + $0x14] sm:$0xf]
        %v286 = vld [vmem:[%s277 + $0x18] sm:$0xf]
        %v287 = vld [vmem:[%s277 + $0x1c] sm:$0xf]
        %v288 = vld [vmem:[%s277 + $0x20] sm:$0xf]
        %v289 = vld [vmem:[%s277 + $0x24] sm:$0xf]
        %v290 = vld [vmem:[%s277 + $0x28] sm:$0xf]
        %v291 = vld [vmem:[%s277 + $0x2c] sm:$0xf]
        %v292 = vld [vmem:[%s277 + $0x30] sm:$0xf]
        %v293 = vld [vmem:[%s277 + $0x34] sm:$0xf]
        %v294 = vld [vmem:[%s277 + $0x38] sm:$0xf]
        %v295 = vld [vmem:[%s277 + $0x3c] sm:$0xf]
        %v296 = vld [vmem:[%s1] sm:$0xf]
        %v297 = vld [vmem:[%s1 + $0x4] sm:$0x1]
        %v298 = vld [vmem:[%s2] sm:$0x1]
        %v300 = vlaneseq
        %v301 = vshrl.u32 %v300, 7
        %v302 = vsub.s32 0, %v301
        %v303 = vrot.slane %v298, %v302
        %v321 = vunpack.c.l.b16 %v280
        %v322 = vunpack.c.l.b16 %v281
        %v323 = vunpack.c.l.b16 %v282
        %v324 = vunpack.c.l.b16 %v283
        %v325 = vunpack.c.l.b16 %v284
        %v326 = vunpack.c.l.b16 %v285
        %v327 = vunpack.c.l.b16 %v286
        %v328 = vunpack.c.l.b16 %v287
        %v329 = vunpack.c.l.b16 %v288
        %v330 = vunpack.c.l.b16 %v289
        %v331 = vunpack.c.l.b16 %v290
        %v332 = vunpack.c.l.b16 %v291
        %v333 = vunpack.c.l.b16 %v292
        %v334 = vunpack.c.l.b16 %v293
        %v335 = vunpack.c.l.b16 %v294
        %v336 = vunpack.c.l.b16 %v295
        %v337 = vpack.c.b16 %v322, %v321
        %v338 = vpack.c.b16 %v324, %v323
        %v339 = vpack.c.b16 %v326, %v325
        %v340 = vpack.c.b16 %v328, %v327
        %v341 = vpack.c.b16 %v330, %v329
        %v342 = vpack.c.b16 %v332, %v331
        %v343 = vpack.c.b16 %v334, %v333
        %v344 = vpack.c.b16 %v336, %v335
        %v347 = vunpack.c.l.b16 %v296
        %v348 = vunpack.c.l.b16 %v297
        %v349 = vpack.c.b16 %v348, %v347
        %vm350 = vcmask 80896
        %v352 = vsel %vm350, %v337, 0
        %v355 = vsel %vm350, %v338, 0
        %v358 = vsel %vm350, %v339, 0
        %v361 = vsel %vm350, %v340, 0
        %v364 = vsel %vm350, %v341, 0
        %v367 = vsel %vm350, %v342, 0
        %v370 = vsel %vm350, %v343, 0
        %v373 = vsel %vm350, %v344, 0
        %vm375 = vcmask 1044480
        %v377 = vsel %vm375, %v349, 0
        %379 = vmatprep.subr.bf16.mxu0 0
        %380 = vmatpush1.bf16.msra.mxu0 0
        %381 = vmatprep.subr.bf16.mxu0 0
        %382 = vmatpush1.bf16.msra.mxu0 0
        %383 = vmatprep.subr.bf16.mxu0 0
        %384 = vmatpush1.bf16.msra.mxu0 0
        %385 = vmatprep.subr.bf16.mxu0 0
        %386 = vmatpush1.bf16.msra.mxu0 0
        %387 = vmatprep.subr.bf16.mxu0 0
        %388 = vmatpush1.bf16.msra.mxu0 0
        %389 = vmatprep.subr.bf16.mxu0 0
        %390 = vmatpush1.bf16.msra.mxu0 0
        %391 = vmatprep.subr.bf16.mxu0 0
        %392 = vmatpush1.bf16.msra.mxu0 0
        %393 = vmatprep.subr.bf16.mxu0 0
        %394 = vmatpush1.bf16.msra.mxu0 %v377
        %395 = vmatprep.subr.bf16.mxu0 0
        %396 = vmatpush2.bf16.msra.mxu0 0
        %397 = vmatprep.subr.bf16.mxu0 0
        %398 = vmatpush2.bf16.msra.mxu0 0
        %399 = vmatprep.subr.bf16.mxu0 0
        %400 = vmatpush2.bf16.msra.mxu0 0
        %401 = vmatprep.subr.bf16.mxu0 0
        %402 = vmatpush2.bf16.msra.mxu0 0
        %403 = vmatprep.subr.bf16.mxu0 0
        %404 = vmatpush2.bf16.msra.mxu0 0
        %405 = vmatprep.subr.bf16.mxu0 0
        %406 = vmatpush2.bf16.msra.mxu0 0
        %407 = vmatprep.subr.bf16.mxu0 0
        %408 = vmatpush2.bf16.msra.mxu0 0
        %409 = vmatprep.subr.bf16.mxu0 0
        %410 = vmatpush2.bf16.msra.mxu0 0
        %411 = vmatprep.mubr.bf16.mxu0 0
        %412 = vmatmul.mubr.bf16.gmra.mxu0 %v352
        %v413 = vpop.f32.mrf.mxu0
        %v414 = vadd.f32 %v303, %v413
        %v415 = vpop.f32.mrf.mxu0
        %v416 = vpop.f32.mrf.mxu0
        %v417 = vadd.f32 %v303, %v416
        %v418 = vpop.f32.mrf.mxu0
        %419 = vmatprep.mubr.bf16.mxu0 0
        %420 = vmatmul.mubr.bf16.gmra.mxu0 %v355
        %v421 = vpop.f32.mrf.mxu0
        %v422 = vadd.f32 %v303, %v421
        %v423 = vpop.f32.mrf.mxu0
        %v424 = vpop.f32.mrf.mxu0
        %v425 = vadd.f32 %v303, %v424
        %v426 = vpop.f32.mrf.mxu0
        %427 = vmatprep.mubr.bf16.mxu0 0
        %428 = vmatmul.mubr.bf16.gmra.mxu0 %v358
        %v429 = vpop.f32.mrf.mxu0
        %v430 = vadd.f32 %v303, %v429
        %v431 = vpop.f32.mrf.mxu0
        %v432 = vpop.f32.mrf.mxu0
        %v433 = vadd.f32 %v303, %v432
        %v434 = vpop.f32.mrf.mxu0
        %435 = vmatprep.mubr.bf16.mxu0 0
        %436 = vmatmul.mubr.bf16.gmra.mxu0 %v361
        %v437 = vpop.f32.mrf.mxu0
        %v438 = vadd.f32 %v303, %v437
        %v439 = vpop.f32.mrf.mxu0
        %v440 = vpop.f32.mrf.mxu0
        %v441 = vadd.f32 %v303, %v440
        %v442 = vpop.f32.mrf.mxu0
        %443 = vmatprep.mubr.bf16.mxu0 0
        %444 = vmatmul.mubr.bf16.gmra.mxu0 %v364
        %v445 = vpop.f32.mrf.mxu0
        %v446 = vadd.f32 %v303, %v445
        %v447 = vpop.f32.mrf.mxu0
        %v448 = vpop.f32.mrf.mxu0
        %v449 = vadd.f32 %v303, %v448
        %v450 = vpop.f32.mrf.mxu0
        %451 = vmatprep.mubr.bf16.mxu0 0
        %452 = vmatmul.mubr.bf16.gmra.mxu0 %v367
        %v453 = vpop.f32.mrf.mxu0
        %v454 = vadd.f32 %v303, %v453
        %v455 = vpop.f32.mrf.mxu0
        %v456 = vpop.f32.mrf.mxu0
        %v457 = vadd.f32 %v303, %v456
        %v458 = vpop.f32.mrf.mxu0
        %459 = vmatprep.mubr.bf16.mxu0 0
        %460 = vmatmul.mubr.bf16.gmra.mxu0 %v370
        %v461 = vpop.f32.mrf.mxu0
        %v462 = vadd.f32 %v303, %v461
        %v463 = vpop.f32.mrf.mxu0
        %v464 = vpop.f32.mrf.mxu0
        %v465 = vadd.f32 %v303, %v464
        %v466 = vpop.f32.mrf.mxu0
        %467 = vmatprep.mubr.bf16.mxu0 0
        %468 = vmatmul.mubr.bf16.gmra.mxu0 %v373
        %v469 = vpop.f32.mrf.mxu0
        %v470 = vadd.f32 %v303, %v469
        %v471 = vpop.f32.mrf.mxu0
        %v472 = vpop.f32.mrf.mxu0
        %v473 = vadd.f32 %v303, %v472
        %v474 = vpop.f32.mrf.mxu0
        %475 = vdwg.mxu0
        %v476 = vmax.f32 %v414, 0.0
        %v477 = vmax.f32 %v417, 0.0
        %v478 = vmax.f32 %v422, 0.0
        %v479 = vmax.f32 %v425, 0.0
        %v480 = vmax.f32 %v430, 0.0
        %v481 = vmax.f32 %v433, 0.0
        %v482 = vmax.f32 %v438, 0.0
        %v483 = vmax.f32 %v441, 0.0
        %v484 = vmax.f32 %v446, 0.0
        %v485 = vmax.f32 %v449, 0.0
        %v486 = vmax.f32 %v454, 0.0
        %v487 = vmax.f32 %v457, 0.0
        %v488 = vmax.f32 %v462, 0.0
        %v489 = vmax.f32 %v465, 0.0
        %v490 = vmax.f32 %v470, 0.0
        %v491 = vmax.f32 %v473, 0.0
        %v492 = vrot.slane %v476, 1
        %v493 = vrot.slane %v477, 1
        %v494 = vrot.slane %v478, 1
        %v495 = vrot.slane %v480, 1
        %v496 = vrot.slane %v481, 1
        %v497 = vrot.slane %v482, 1
        %v498 = vrot.slane %v484, 1
        %v499 = vrot.slane %v485, 1
        %v500 = vrot.slane %v486, 1
        %v501 = vrot.slane %v488, 1
        %v502 = vrot.slane %v489, 1
        %v503 = vrot.slane %v490, 1
        %v504 = vlaneseq
        %v505 = vshrl.u32 %v504, 7
        %vm506 = vcmp.lt.s32.totalorder %v505, 7
        %v507 = vsel %vm506, %v502, %v503
        %v508 = vsel %vm506, %v501, %v502
        %v509 = vsel %vm506, %v499, %v500
        %v510 = vsel %vm506, %v498, %v499
        %v511 = vsel %vm506, %v496, %v497
        %v512 = vsel %vm506, %v495, %v496
        %v513 = vsel %vm506, %v493, %v494
        %v514 = vsel %vm506, %v492, %v493
        %v515 = vpack.c.bf16 %v477, %v476
        %v516 = vpack.c.bf16 %v481, %v480
        %v517 = vpack.c.bf16 %v485, %v484
        %v518 = vpack.c.bf16 %v489, %v488
        %v519 = vpack.c.bf16 %v479, %v478
        %v520 = vpack.c.bf16 %v483, %v482
        %v521 = vpack.c.bf16 %v487, %v486
        %v522 = vpack.c.bf16 %v491, %v490
        %v523 = vpack.c.bf16 %v513, %v514
        %v524 = vpack.c.bf16 %v511, %v512
        %v525 = vpack.c.bf16 %v509, %v510
        %v526 = vpack.c.bf16 %v507, %v508
        %v527 = vld [vmem:[%s3] sm:$0xf]
        %v528 = vld [vmem:[%s3 + $0x4] sm:$0xf]
        %v529 = vld [vmem:[%s3 + $0x8] sm:$0xf]
        %v530 = vld [vmem:[%s3 + $0xc] sm:$0xf]
        %v531 = vld [vmem:[%s3 + $0x10] sm:$0xf]
        %v532 = vld [vmem:[%s3 + $0x14] sm:$0xf]
        %v533 = vld [vmem:[%s3 + $0x18] sm:$0xf]
        %v534 = vld [vmem:[%s3 + $0x1c] sm:$0xf]
        %v535 = vld [vmem:[%s3 + $0x20] sm:$0xf]
        %v536 = vld [vmem:[%s3 + $0x24] sm:$0xf]
        %v537 = vld [vmem:[%s3 + $0x28] sm:$0xf]
        %v538 = vld [vmem:[%s3 + $0x2c] sm:$0xf]
        %v539 = vld [vmem:[%s3 + $0x30] sm:$0xf]
        %v540 = vld [vmem:[%s3 + $0x34] sm:$0xf]
        %v541 = vld [vmem:[%s3 + $0x38] sm:$0xf]
        %v542 = vld [vmem:[%s3 + $0x3c] sm:$0xf]
        %v543 = vld [vmem:[%s3 + $0x40] sm:$0xf]
        %v544 = vld [vmem:[%s3 + $0x44] sm:$0xf]
        %v545 = vld [vmem:[%s3 + $0x48] sm:$0xf]
        %v546 = vld [vmem:[%s3 + $0x4c] sm:$0xf]
        %v547 = vld [vmem:[%s3 + $0x50] sm:$0xf]
        %v548 = vld [vmem:[%s3 + $0x54] sm:$0xf]
        %v549 = vld [vmem:[%s3 + $0x58] sm:$0xf]
        %v550 = vld [vmem:[%s3 + $0x5c] sm:$0xf]
        %v551 = vld [vmem:[%s3 + $0x60] sm:$0xf]
        %v552 = vld [vmem:[%s3 + $0x64] sm:$0xf]
        %v553 = vld [vmem:[%s3 + $0x68] sm:$0xf]
        %v554 = vld [vmem:[%s3 + $0x6c] sm:$0xf]
        %v555 = vld [vmem:[%s3 + $0x70] sm:$0xf]
        %v556 = vld [vmem:[%s3 + $0x74] sm:$0xf]
        %v557 = vld [vmem:[%s3 + $0x78] sm:$0xf]
        %v558 = vld [vmem:[%s3 + $0x7c] sm:$0xf]
        %v559 = vld [vmem:[%s3 + $0x80] sm:$0xf]
        %v560 = vld [vmem:[%s3 + $0x84] sm:$0xf]
        %v561 = vld [vmem:[%s3 + $0x88] sm:$0xf]
        %v562 = vld [vmem:[%s3 + $0x8c] sm:$0xf]
        %v563 = vld [vmem:[%s3 + $0x90] sm:$0xf]
        %v564 = vld [vmem:[%s3 + $0x94] sm:$0xf]
        %v565 = vld [vmem:[%s3 + $0x98] sm:$0xf]
        %v566 = vld [vmem:[%s3 + $0x9c] sm:$0xf]
        %v567 = vld [vmem:[%s3 + $0xa0] sm:$0xf]
        %v568 = vld [vmem:[%s3 + $0xa4] sm:$0xf]
        %v569 = vld [vmem:[%s3 + $0xa8] sm:$0xf]
        %v570 = vld [vmem:[%s3 + $0xac] sm:$0xf]
        %v571 = vld [vmem:[%s3 + $0xb0] sm:$0xf]
        %v572 = vld [vmem:[%s3 + $0xb4] sm:$0xf]
        %v573 = vld [vmem:[%s3 + $0xb8] sm:$0xf]
        %v574 = vld [vmem:[%s3 + $0xbc] sm:$0xf]
        %v575 = vld [vmem:[%s3 + $0xc0] sm:$0xf]
        %v576 = vld [vmem:[%s3 + $0xc4] sm:$0xf]
        %v577 = vld [vmem:[%s3 + $0xc8] sm:$0xf]
        %v578 = vld [vmem:[%s3 + $0xcc] sm:$0xf]
        %v579 = vld [vmem:[%s3 + $0xd0] sm:$0xf]
        %v580 = vld [vmem:[%s3 + $0xd4] sm:$0xf]
        %v581 = vld [vmem:[%s3 + $0xd8] sm:$0xf]
        %v582 = vld [vmem:[%s3 + $0xdc] sm:$0xf]
        %v583 = vld [vmem:[%s3 + $0xe0] sm:$0xf]
        %v584 = vld [vmem:[%s3 + $0xe4] sm:$0xf]
        %v585 = vld [vmem:[%s3 + $0xe8] sm:$0xf]
        %v586 = vld [vmem:[%s3 + $0xec] sm:$0xf]
        %v587 = vld [vmem:[%s3 + $0xf0] sm:$0xf]
        %v588 = vld [vmem:[%s3 + $0xf4] sm:$0xf]
        %v589 = vld [vmem:[%s3 + $0xf8] sm:$0xf]
        %v590 = vld [vmem:[%s3 + $0xfc] sm:$0xf]
        %v591 = vld [vmem:[%s3 + $0x100] sm:$0xf]
        %v592 = vld [vmem:[%s3 + $0x104] sm:$0xf]
        %v593 = vld [vmem:[%s3 + $0x108] sm:$0xf]
        %v594 = vld [vmem:[%s3 + $0x10c] sm:$0xf]
        %v595 = vld [vmem:[%s3 + $0x110] sm:$0xf]
        %v596 = vld [vmem:[%s3 + $0x114] sm:$0xf]
        %v597 = vld [vmem:[%s3 + $0x118] sm:$0xf]
        %v598 = vld [vmem:[%s3 + $0x11c] sm:$0xf]
        %v599 = vld [vmem:[%s3 + $0x120] sm:$0xf]
        %v600 = vld [vmem:[%s3 + $0x124] sm:$0xf]
        %v601 = vld [vmem:[%s3 + $0x128] sm:$0xf]
        %v602 = vld [vmem:[%s3 + $0x12c] sm:$0xf]
        %v603 = vld [vmem:[%s3 + $0x130] sm:$0xf]
        %v604 = vld [vmem:[%s3 + $0x134] sm:$0xf]
        %v605 = vld [vmem:[%s3 + $0x138] sm:$0xf]
        %v606 = vld [vmem:[%s3 + $0x13c] sm:$0xf]
        %v607 = vld [vmem:[%s3 + $0x140] sm:$0xf]
        %v608 = vld [vmem:[%s3 + $0x144] sm:$0xf]
        %v609 = vld [vmem:[%s3 + $0x148] sm:$0xf]
        %v610 = vld [vmem:[%s3 + $0x14c] sm:$0xf]
        %v611 = vld [vmem:[%s3 + $0x150] sm:$0xf]
        %v612 = vld [vmem:[%s3 + $0x154] sm:$0xf]
        %v613 = vld [vmem:[%s3 + $0x158] sm:$0xf]
        %v614 = vld [vmem:[%s3 + $0x15c] sm:$0xf]
        %v615 = vld [vmem:[%s3 + $0x160] sm:$0xf]
        %v616 = vld [vmem:[%s3 + $0x164] sm:$0xf]
        %v617 = vld [vmem:[%s3 + $0x168] sm:$0xf]
        %v618 = vld [vmem:[%s3 + $0x16c] sm:$0xf]
        %v619 = vld [vmem:[%s3 + $0x170] sm:$0xf]
        %v620 = vld [vmem:[%s3 + $0x174] sm:$0xf]
        %v621 = vld [vmem:[%s3 + $0x178] sm:$0xf]
        %v622 = vld [vmem:[%s3 + $0x17c] sm:$0xf]
        %v623 = vld [vmem:[%s3 + $0x180] sm:$0xf]
        %v624 = vld [vmem:[%s3 + $0x184] sm:$0xf]
        %v625 = vld [vmem:[%s3 + $0x188] sm:$0xf]
        %v626 = vld [vmem:[%s3 + $0x18c] sm:$0xf]
        %v627 = vld [vmem:[%s3 + $0x190] sm:$0xf]
        %v628 = vld [vmem:[%s3 + $0x194] sm:$0xf]
        %v629 = vld [vmem:[%s3 + $0x198] sm:$0xf]
        %v630 = vld [vmem:[%s3 + $0x19c] sm:$0xf]
        %v631 = vld [vmem:[%s3 + $0x1a0] sm:$0xf]
        %v632 = vld [vmem:[%s3 + $0x1a4] sm:$0xf]
        %v633 = vld [vmem:[%s3 + $0x1a8] sm:$0xf]
        %v634 = vld [vmem:[%s3 + $0x1ac] sm:$0xf]
        %v635 = vld [vmem:[%s3 + $0x1b0] sm:$0xf]
        %v636 = vld [vmem:[%s3 + $0x1b4] sm:$0xf]
        %v637 = vld [vmem:[%s3 + $0x1b8] sm:$0xf]
        %v638 = vld [vmem:[%s3 + $0x1bc] sm:$0xf]
        %v639 = vld [vmem:[%s3 + $0x1c0] sm:$0xf]
        %v640 = vld [vmem:[%s3 + $0x1c4] sm:$0xf]
        %v641 = vld [vmem:[%s3 + $0x1c8] sm:$0xf]
        %v642 = vld [vmem:[%s3 + $0x1cc] sm:$0xf]
        %v643 = vld [vmem:[%s3 + $0x1d0] sm:$0xf]
        %v644 = vld [vmem:[%s3 + $0x1d4] sm:$0xf]
        %v645 = vld [vmem:[%s3 + $0x1d8] sm:$0xf]
        %v646 = vld [vmem:[%s3 + $0x1dc] sm:$0xf]
        %v647 = vld [vmem:[%s3 + $0x1e0] sm:$0xf]
        %v648 = vld [vmem:[%s3 + $0x1e4] sm:$0xf]
        %v649 = vld [vmem:[%s3 + $0x1e8] sm:$0xf]
        %v650 = vld [vmem:[%s3 + $0x1ec] sm:$0xf]
        %v651 = vld [vmem:[%s3 + $0x1f0] sm:$0xf]
        %v652 = vld [vmem:[%s3 + $0x1f4] sm:$0xf]
        %v653 = vld [vmem:[%s3 + $0x1f8] sm:$0xf]
        %v654 = vld [vmem:[%s3 + $0x1fc] sm:$0xf]
        %v655 = vld [vmem:[%s4] sm:$0x1]
        %v657 = vlaneseq
        %v658 = vshrl.u32 %v657, 7
        %v659 = vsub.s32 0, %v658
        %v660 = vrot.slane %v655, %v659
        %v790 = vunpack.c.l.b16 %v527
        %v791 = vunpack.c.l.b16 %v528
        %v792 = vunpack.c.l.b16 %v529
        %v793 = vunpack.c.l.b16 %v530
        %v794 = vunpack.c.l.b16 %v531
        %v795 = vunpack.c.l.b16 %v532
        %v796 = vunpack.c.l.b16 %v533
        %v797 = vunpack.c.l.b16 %v534
        %v798 = vunpack.c.l.b16 %v535
        %v799 = vunpack.c.l.b16 %v536
        %v800 = vunpack.c.l.b16 %v537
        %v801 = vunpack.c.l.b16 %v538
        %v802 = vunpack.c.l.b16 %v539
        %v803 = vunpack.c.l.b16 %v540
        %v804 = vunpack.c.l.b16 %v541
        %v805 = vunpack.c.l.b16 %v542
        %v806 = vunpack.c.l.b16 %v543
        %v807 = vunpack.c.l.b16 %v544
        %v808 = vunpack.c.l.b16 %v545
        %v809 = vunpack.c.l.b16 %v546
        %v810 = vunpack.c.l.b16 %v547
        %v811 = vunpack.c.l.b16 %v548
        %v812 = vunpack.c.l.b16 %v549
        %v813 = vunpack.c.l.b16 %v550
        %v814 = vunpack.c.l.b16 %v551
        %v815 = vunpack.c.l.b16 %v552
        %v816 = vunpack.c.l.b16 %v553
        %v817 = vunpack.c.l.b16 %v554
        %v818 = vunpack.c.l.b16 %v555
        %v819 = vunpack.c.l.b16 %v556
        %v820 = vunpack.c.l.b16 %v557
        %v821 = vunpack.c.l.b16 %v558
        %v822 = vunpack.c.l.b16 %v559
        %v823 = vunpack.c.l.b16 %v560
        %v824 = vunpack.c.l.b16 %v561
        %v825 = vunpack.c.l.b16 %v562
        %v826 = vunpack.c.l.b16 %v563
        %v827 = vunpack.c.l.b16 %v564
        %v828 = vunpack.c.l.b16 %v565
        %v829 = vunpack.c.l.b16 %v566
        %v830 = vunpack.c.l.b16 %v567
        %v831 = vunpack.c.l.b16 %v568
        %v832 = vunpack.c.l.b16 %v569
        %v833 = vunpack.c.l.b16 %v570
        %v834 = vunpack.c.l.b16 %v571
        %v835 = vunpack.c.l.b16 %v572
        %v836 = vunpack.c.l.b16 %v573
        %v837 = vunpack.c.l.b16 %v574
        %v838 = vunpack.c.l.b16 %v575
        %v839 = vunpack.c.l.b16 %v576
        %v840 = vunpack.c.l.b16 %v577
        %v841 = vunpack.c.l.b16 %v578
        %v842 = vunpack.c.l.b16 %v579
        %v843 = vunpack.c.l.b16 %v580
        %v844 = vunpack.c.l.b16 %v581
        %v845 = vunpack.c.l.b16 %v582
        %v846 = vunpack.c.l.b16 %v583
        %v847 = vunpack.c.l.b16 %v584
        %v848 = vunpack.c.l.b16 %v585
        %v849 = vunpack.c.l.b16 %v586
        %v850 = vunpack.c.l.b16 %v587
        %v851 = vunpack.c.l.b16 %v588
        %v852 = vunpack.c.l.b16 %v589
        %v853 = vunpack.c.l.b16 %v590
        %v854 = vunpack.c.l.b16 %v591
        %v855 = vunpack.c.l.b16 %v592
        %v856 = vunpack.c.l.b16 %v593
        %v857 = vunpack.c.l.b16 %v594
        %v858 = vunpack.c.l.b16 %v595
        %v859 = vunpack.c.l.b16 %v596
        %v860 = vunpack.c.l.b16 %v597
        %v861 = vunpack.c.l.b16 %v598
        %v862 = vunpack.c.l.b16 %v599
        %v863 = vunpack.c.l.b16 %v600
        %v864 = vunpack.c.l.b16 %v601
        %v865 = vunpack.c.l.b16 %v602
        %v866 = vunpack.c.l.b16 %v603
        %v867 = vunpack.c.l.b16 %v604
        %v868 = vunpack.c.l.b16 %v605
        %v869 = vunpack.c.l.b16 %v606
        %v870 = vunpack.c.l.b16 %v607
        %v871 = vunpack.c.l.b16 %v608
        %v872 = vunpack.c.l.b16 %v609
        %v873 = vunpack.c.l.b16 %v610
        %v874 = vunpack.c.l.b16 %v611
        %v875 = vunpack.c.l.b16 %v612
        %v876 = vunpack.c.l.b16 %v613
        %v877 = vunpack.c.l.b16 %v614
        %v878 = vunpack.c.l.b16 %v615
        %v879 = vunpack.c.l.b16 %v616
        %v880 = vunpack.c.l.b16 %v617
        %v881 = vunpack.c.l.b16 %v618
        %v882 = vunpack.c.l.b16 %v619
        %v883 = vunpack.c.l.b16 %v620
        %v884 = vunpack.c.l.b16 %v621
        %v885 = vunpack.c.l.b16 %v622
        %v886 = vunpack.c.l.b16 %v623
        %v887 = vunpack.c.l.b16 %v624
        %v888 = vunpack.c.l.b16 %v625
        %v889 = vunpack.c.l.b16 %v626
        %v890 = vunpack.c.l.b16 %v627
        %v891 = vunpack.c.l.b16 %v628
        %v892 = vunpack.c.l.b16 %v629
        %v893 = vunpack.c.l.b16 %v630
        %v894 = vunpack.c.l.b16 %v631
        %v895 = vunpack.c.l.b16 %v632
        %v896 = vunpack.c.l.b16 %v633
        %v897 = vunpack.c.l.b16 %v634
        %v898 = vunpack.c.l.b16 %v635
        %v899 = vunpack.c.l.b16 %v636
        %v900 = vunpack.c.l.b16 %v637
        %v901 = vunpack.c.l.b16 %v638
        %v902 = vunpack.c.l.b16 %v639
        %v903 = vunpack.c.l.b16 %v640
        %v904 = vunpack.c.l.b16 %v641
        %v905 = vunpack.c.l.b16 %v642
        %v906 = vunpack.c.l.b16 %v643
        %v907 = vunpack.c.l.b16 %v644
        %v908 = vunpack.c.l.b16 %v645
        %v909 = vunpack.c.l.b16 %v646
        %v910 = vunpack.c.l.b16 %v647
        %v911 = vunpack.c.l.b16 %v648
        %v912 = vunpack.c.l.b16 %v649
        %v913 = vunpack.c.l.b16 %v650
        %v914 = vunpack.c.l.b16 %v651
        %v915 = vunpack.c.l.b16 %v652
        %v916 = vunpack.c.l.b16 %v653
        %v917 = vunpack.c.l.b16 %v654
        %v918 = vpack.c.b16 %v791, %v790
        %v919 = vpack.c.b16 %v793, %v792
        %v920 = vpack.c.b16 %v795, %v794
        %v921 = vpack.c.b16 %v797, %v796
        %v922 = vpack.c.b16 %v799, %v798
        %v923 = vpack.c.b16 %v801, %v800
        %v924 = vpack.c.b16 %v803, %v802
        %v925 = vpack.c.b16 %v805, %v804
        %v926 = vpack.c.b16 %v807, %v806
        %v927 = vpack.c.b16 %v809, %v808
        %v928 = vpack.c.b16 %v811, %v810
        %v929 = vpack.c.b16 %v813, %v812
        %v930 = vpack.c.b16 %v815, %v814
        %v931 = vpack.c.b16 %v817, %v816
        %v932 = vpack.c.b16 %v819, %v818
        %v933 = vpack.c.b16 %v821, %v820
        %v934 = vpack.c.b16 %v823, %v822
        %v935 = vpack.c.b16 %v825, %v824
        %v936 = vpack.c.b16 %v827, %v826
        %v937 = vpack.c.b16 %v829, %v828
        %v938 = vpack.c.b16 %v831, %v830
        %v939 = vpack.c.b16 %v833, %v832
        %v940 = vpack.c.b16 %v835, %v834
        %v941 = vpack.c.b16 %v837, %v836
        %v942 = vpack.c.b16 %v839, %v838
        %v943 = vpack.c.b16 %v841, %v840
        %v944 = vpack.c.b16 %v843, %v842
        %v945 = vpack.c.b16 %v845, %v844
        %v946 = vpack.c.b16 %v847, %v846
        %v947 = vpack.c.b16 %v849, %v848
        %v948 = vpack.c.b16 %v851, %v850
        %v949 = vpack.c.b16 %v853, %v852
        %v950 = vpack.c.b16 %v855, %v854
        %v951 = vpack.c.b16 %v857, %v856
        %v952 = vpack.c.b16 %v859, %v858
        %v953 = vpack.c.b16 %v861, %v860
        %v954 = vpack.c.b16 %v863, %v862
        %v955 = vpack.c.b16 %v865, %v864
        %v956 = vpack.c.b16 %v867, %v866
        %v957 = vpack.c.b16 %v869, %v868
        %v958 = vpack.c.b16 %v871, %v870
        %v959 = vpack.c.b16 %v873, %v872
        %v960 = vpack.c.b16 %v875, %v874
        %v961 = vpack.c.b16 %v877, %v876
        %v962 = vpack.c.b16 %v879, %v878
        %v963 = vpack.c.b16 %v881, %v880
        %v964 = vpack.c.b16 %v883, %v882
        %v965 = vpack.c.b16 %v885, %v884
        %v966 = vpack.c.b16 %v887, %v886
        %v967 = vpack.c.b16 %v889, %v888
        %v968 = vpack.c.b16 %v891, %v890
        %v969 = vpack.c.b16 %v893, %v892
        %v970 = vpack.c.b16 %v895, %v894
        %v971 = vpack.c.b16 %v897, %v896
        %v972 = vpack.c.b16 %v899, %v898
        %v973 = vpack.c.b16 %v901, %v900
        %v974 = vpack.c.b16 %v903, %v902
        %v975 = vpack.c.b16 %v905, %v904
        %v976 = vpack.c.b16 %v907, %v906
        %v977 = vpack.c.b16 %v909, %v908
        %v978 = vpack.c.b16 %v911, %v910
        %v979 = vpack.c.b16 %v913, %v912
        %v980 = vpack.c.b16 %v915, %v914
        %v981 = vpack.c.b16 %v917, %v916
        %1046 = vmatprep.subr.bf16.mxu0 0
        %1047 = vmatpush1.bf16.msra.mxu0 %v925
        %1048 = vmatprep.subr.bf16.mxu0 0
        %1049 = vmatpush1.bf16.msra.mxu0 %v924
        %1050 = vmatprep.subr.bf16.mxu0 0
        %1051 = vmatpush1.bf16.msra.mxu0 %v923
        %1052 = vmatprep.subr.bf16.mxu0 0
        %1053 = vmatpush1.bf16.msra.mxu0 %v922
        %1054 = vmatprep.subr.bf16.mxu0 0
        %1055 = vmatpush1.bf16.msra.mxu0 %v921
        %1056 = vmatprep.subr.bf16.mxu0 0
        %1057 = vmatpush1.bf16.msra.mxu0 %v920
        %1058 = vmatprep.subr.bf16.mxu0 0
        %1059 = vmatpush1.bf16.msra.mxu0 %v919
        %1060 = vmatprep.subr.bf16.mxu0 0
        %1061 = vmatpush1.bf16.msra.mxu0 %v918
        %1062 = vmatprep.subr.bf16.mxu0 0
        %1063 = vmatpush2.bf16.msra.mxu0 %v933
        %1064 = vmatprep.subr.bf16.mxu0 0
        %1065 = vmatpush2.bf16.msra.mxu0 %v932
        %1066 = vmatprep.subr.bf16.mxu0 0
        %1067 = vmatpush2.bf16.msra.mxu0 %v931
        %1068 = vmatprep.subr.bf16.mxu0 0
        %1069 = vmatpush2.bf16.msra.mxu0 %v930
        %1070 = vmatprep.subr.bf16.mxu0 0
        %1071 = vmatpush2.bf16.msra.mxu0 %v929
        %1072 = vmatprep.subr.bf16.mxu0 0
        %1073 = vmatpush2.bf16.msra.mxu0 %v928
        %1074 = vmatprep.subr.bf16.mxu0 0
        %1075 = vmatpush2.bf16.msra.mxu0 %v927
        %1076 = vmatprep.subr.bf16.mxu0 0
        %1077 = vmatpush2.bf16.msra.mxu0 %v926
        %1078 = vmatprep.mubr.bf16.mxu0 %v516
        %1079 = vmatmul.mubr.bf16.gmra.mxu0 %v515
        %v1080 = vpop.f32.mrf.mxu0
        %v1081 = vadd.f32 %v660, %v1080
        %v1082 = vpop.f32.mrf.mxu0
        %v1083 = vpop.f32.mrf.mxu0
        %v1084 = vadd.f32 %v660, %v1083
        %v1085 = vpop.f32.mrf.mxu0
        %1086 = vmatprep.mubr.bf16.mxu0 %v520
        %1087 = vmatmul.mubr.bf16.gmra.mxu0 %v519
        %v1088 = vpop.f32.mrf.mxu0
        %v1089 = vadd.f32 %v660, %v1088
        %v1090 = vpop.f32.mrf.mxu0
        %v1091 = vpop.f32.mrf.mxu0
        %v1092 = vadd.f32 %v660, %v1091
        %v1093 = vpop.f32.mrf.mxu0
        %1094 = vdwg.mxu0
        %1095 = vmatprep.subr.bf16.mxu0 0
        %1096 = vmatpush1.bf16.msra.mxu0 %v941
        %1097 = vmatprep.subr.bf16.mxu0 0
        %1098 = vmatpush1.bf16.msra.mxu0 %v940
        %1099 = vmatprep.subr.bf16.mxu0 0
        %1100 = vmatpush1.bf16.msra.mxu0 %v939
        %1101 = vmatprep.subr.bf16.mxu0 0
        %1102 = vmatpush1.bf16.msra.mxu0 %v938
        %1103 = vmatprep.subr.bf16.mxu0 0
        %1104 = vmatpush1.bf16.msra.mxu0 %v937
        %1105 = vmatprep.subr.bf16.mxu0 0
        %1106 = vmatpush1.bf16.msra.mxu0 %v936
        %1107 = vmatprep.subr.bf16.mxu0 0
        %1108 = vmatpush1.bf16.msra.mxu0 %v935
        %1109 = vmatprep.subr.bf16.mxu0 0
        %1110 = vmatpush1.bf16.msra.mxu0 %v934
        %1111 = vmatprep.subr.bf16.mxu0 0
        %1112 = vmatpush2.bf16.msra.mxu0 %v949
        %1113 = vmatprep.subr.bf16.mxu0 0
        %1114 = vmatpush2.bf16.msra.mxu0 %v948
        %1115 = vmatprep.subr.bf16.mxu0 0
        %1116 = vmatpush2.bf16.msra.mxu0 %v947
        %1117 = vmatprep.subr.bf16.mxu0 0
        %1118 = vmatpush2.bf16.msra.mxu0 %v946
        %1119 = vmatprep.subr.bf16.mxu0 0
        %1120 = vmatpush2.bf16.msra.mxu0 %v945
        %1121 = vmatprep.subr.bf16.mxu0 0
        %1122 = vmatpush2.bf16.msra.mxu0 %v944
        %1123 = vmatprep.subr.bf16.mxu0 0
        %1124 = vmatpush2.bf16.msra.mxu0 %v943
        %1125 = vmatprep.subr.bf16.mxu0 0
        %1126 = vmatpush2.bf16.msra.mxu0 %v942
        %1127 = vmatprep.mubr.bf16.mxu0 %v518
        %1128 = vmatmul.mubr.bf16.gmra.mxu0 %v517
        %v1129 = vpop.f32.mrf.mxu0
        %v1130 = vadd.f32 %v1081, %v1129
        %v1131 = vpop.f32.mrf.mxu0
        %v1132 = vpop.f32.mrf.mxu0
        %v1133 = vadd.f32 %v1084, %v1132
        %v1134 = vpop.f32.mrf.mxu0
        %1135 = vmatprep.mubr.bf16.mxu0 %v522
        %1136 = vmatmul.mubr.bf16.gmra.mxu0 %v521
        %v1137 = vpop.f32.mrf.mxu0
        %v1138 = vadd.f32 %v1089, %v1137
        %v1139 = vpop.f32.mrf.mxu0
        %v1140 = vpop.f32.mrf.mxu0
        %v1141 = vadd.f32 %v1092, %v1140
        %v1142 = vpop.f32.mrf.mxu0
        %1143 = vdwg.mxu0
        %1144 = vmatprep.subr.bf16.mxu0 0
        %1145 = vmatpush1.bf16.msra.mxu0 %v957
        %1146 = vmatprep.subr.bf16.mxu0 0
        %1147 = vmatpush1.bf16.msra.mxu0 %v956
        %1148 = vmatprep.subr.bf16.mxu0 0
        %1149 = vmatpush1.bf16.msra.mxu0 %v955
        %1150 = vmatprep.subr.bf16.mxu0 0
        %1151 = vmatpush1.bf16.msra.mxu0 %v954
        %1152 = vmatprep.subr.bf16.mxu0 0
        %1153 = vmatpush1.bf16.msra.mxu0 %v953
        %1154 = vmatprep.subr.bf16.mxu0 0
        %1155 = vmatpush1.bf16.msra.mxu0 %v952
        %1156 = vmatprep.subr.bf16.mxu0 0
        %1157 = vmatpush1.bf16.msra.mxu0 %v951
        %1158 = vmatprep.subr.bf16.mxu0 0
        %1159 = vmatpush1.bf16.msra.mxu0 %v950
        %1160 = vmatprep.subr.bf16.mxu0 0
        %1161 = vmatpush2.bf16.msra.mxu0 %v965
        %1162 = vmatprep.subr.bf16.mxu0 0
        %1163 = vmatpush2.bf16.msra.mxu0 %v964
        %1164 = vmatprep.subr.bf16.mxu0 0
        %1165 = vmatpush2.bf16.msra.mxu0 %v963
        %1166 = vmatprep.subr.bf16.mxu0 0
        %1167 = vmatpush2.bf16.msra.mxu0 %v962
        %1168 = vmatprep.subr.bf16.mxu0 0
        %1169 = vmatpush2.bf16.msra.mxu0 %v961
        %1170 = vmatprep.subr.bf16.mxu0 0
        %1171 = vmatpush2.bf16.msra.mxu0 %v960
        %1172 = vmatprep.subr.bf16.mxu0 0
        %1173 = vmatpush2.bf16.msra.mxu0 %v959
        %1174 = vmatprep.subr.bf16.mxu0 0
        %1175 = vmatpush2.bf16.msra.mxu0 %v958
        %1176 = vmatprep.mubr.bf16.mxu0 %v520
        %1177 = vmatmul.mubr.bf16.gmra.mxu0 %v519
        %v1178 = vpop.f32.mrf.mxu0
        %v1179 = vadd.f32 %v1130, %v1178
        %v1180 = vpop.f32.mrf.mxu0
        %v1181 = vpop.f32.mrf.mxu0
        %v1182 = vadd.f32 %v1133, %v1181
        %v1183 = vpop.f32.mrf.mxu0
        %1184 = vmatprep.mubr.bf16.mxu0 %v524
        %1185 = vmatmul.mubr.bf16.gmra.mxu0 %v523
        %v1186 = vpop.f32.mrf.mxu0
        %v1187 = vadd.f32 %v1138, %v1186
        %v1188 = vpop.f32.mrf.mxu0
        %v1189 = vpop.f32.mrf.mxu0
        %v1190 = vadd.f32 %v1141, %v1189
        %v1191 = vpop.f32.mrf.mxu0
        %1192 = vdwg.mxu0
        %1193 = vmatprep.subr.bf16.mxu0 0
        %1194 = vmatpush1.bf16.msra.mxu0 %v973
        %1195 = vmatprep.subr.bf16.mxu0 0
        %1196 = vmatpush1.bf16.msra.mxu0 %v972
        %1197 = vmatprep.subr.bf16.mxu0 0
        %1198 = vmatpush1.bf16.msra.mxu0 %v971
        %1199 = vmatprep.subr.bf16.mxu0 0
        %1200 = vmatpush1.bf16.msra.mxu0 %v970
        %1201 = vmatprep.subr.bf16.mxu0 0
        %1202 = vmatpush1.bf16.msra.mxu0 %v969
        %1203 = vmatprep.subr.bf16.mxu0 0
        %1204 = vmatpush1.bf16.msra.mxu0 %v968
        %1205 = vmatprep.subr.bf16.mxu0 0
        %1206 = vmatpush1.bf16.msra.mxu0 %v967
        %1207 = vmatprep.subr.bf16.mxu0 0
        %1208 = vmatpush1.bf16.msra.mxu0 %v966
        %1209 = vmatprep.subr.bf16.mxu0 0
        %1210 = vmatpush2.bf16.msra.mxu0 %v981
        %1211 = vmatprep.subr.bf16.mxu0 0
        %1212 = vmatpush2.bf16.msra.mxu0 %v980
        %1213 = vmatprep.subr.bf16.mxu0 0
        %1214 = vmatpush2.bf16.msra.mxu0 %v979
        %1215 = vmatprep.subr.bf16.mxu0 0
        %1216 = vmatpush2.bf16.msra.mxu0 %v978
        %1217 = vmatprep.subr.bf16.mxu0 0
        %1218 = vmatpush2.bf16.msra.mxu0 %v977
        %1219 = vmatprep.subr.bf16.mxu0 0
        %1220 = vmatpush2.bf16.msra.mxu0 %v976
        %1221 = vmatprep.subr.bf16.mxu0 0
        %1222 = vmatpush2.bf16.msra.mxu0 %v975
        %1223 = vmatprep.subr.bf16.mxu0 0
        %1224 = vmatpush2.bf16.msra.mxu0 %v974
        %1225 = vmatprep.mubr.bf16.mxu0 %v522
        %1226 = vmatmul.mubr.bf16.gmra.mxu0 %v521
        %v1227 = vpop.f32.mrf.mxu0
        %v1228 = vadd.f32 %v1179, %v1227
        %v1229 = vpop.f32.mrf.mxu0
        %v1230 = vpop.f32.mrf.mxu0
        %v1231 = vadd.f32 %v1182, %v1230
        %v1232 = vpop.f32.mrf.mxu0
        %1233 = vmatprep.mubr.bf16.mxu0 %v526
        %1234 = vmatmul.mubr.bf16.gmra.mxu0 %v525
        %v1235 = vpop.f32.mrf.mxu0
        %v1236 = vadd.f32 %v1187, %v1235
        %v1237 = vpop.f32.mrf.mxu0
        %v1238 = vpop.f32.mrf.mxu0
        %v1239 = vadd.f32 %v1190, %v1238
        %v1240 = vpop.f32.mrf.mxu0
        %1241 = vdwg.mxu0
        %v1242 = vmax.f32 %v1228, 0.0
        %v1243 = vmax.f32 %v1231, 0.0
        %v1244 = vmax.f32 %v1236, 0.0
        %v1245 = vmax.f32 %v1239, 0.0
        %v1246 = vrot.slane %v1242, 1
        %v1247 = vrot.slane %v1243, 1
        %v1248 = vrot.slane %v1244, 1
        %v1249 = vrot.slane %v1245, 1
        %v1250 = vsel %vm506, %v1248, %v1249
        %v1251 = vsel %vm506, %v1246, %v1247
        %v1252 = vpack.c.bf16 %v1242, %v1242
        %v1253 = vpack.c.bf16 %v1244, %v1244
        %v1254 = vpack.c.bf16 %v1251, %v1251
        %v1255 = vpack.c.bf16 %v1250, %v1250
        %v1256 = vld [vmem:[%s5] sm:$0xff]
        %v1257 = vld [vmem:[%s5 + $0x8] sm:$0xff]
        %v1258 = vld [vmem:[%s5 + $0x10] sm:$0xff]
        %v1259 = vld [vmem:[%s5 + $0x18] sm:$0xff]
        %v1260 = vld [vmem:[%s5 + $0x20] sm:$0xff]
        %v1261 = vld [vmem:[%s5 + $0x28] sm:$0xff]
        %v1262 = vld [vmem:[%s5 + $0x30] sm:$0xff]
        %v1263 = vld [vmem:[%s5 + $0x38] sm:$0xff]
        %v1264 = vld [vmem:[%s5 + $0x40] sm:$0xff]
        %v1265 = vld [vmem:[%s5 + $0x48] sm:$0xff]
        %v1266 = vld [vmem:[%s5 + $0x50] sm:$0xff]
        %v1267 = vld [vmem:[%s5 + $0x58] sm:$0xff]
        %v1268 = vld [vmem:[%s5 + $0x60] sm:$0xff]
        %v1269 = vld [vmem:[%s5 + $0x68] sm:$0xff]
        %v1270 = vld [vmem:[%s5 + $0x70] sm:$0xff]
        %v1271 = vld [vmem:[%s5 + $0x78] sm:$0xff]
        %v1272 = vld [vmem:[%s5 + $0x80] sm:$0xff]
        %v1273 = vld [vmem:[%s5 + $0x88] sm:$0xff]
        %v1274 = vld [vmem:[%s5 + $0x90] sm:$0xff]
        %v1275 = vld [vmem:[%s5 + $0x98] sm:$0xff]
        %v1276 = vld [vmem:[%s5 + $0xa0] sm:$0xff]
        %v1277 = vld [vmem:[%s5 + $0xa8] sm:$0xff]
        %v1278 = vld [vmem:[%s5 + $0xb0] sm:$0xff]
        %v1279 = vld [vmem:[%s5 + $0xb8] sm:$0xff]
        %v1280 = vld [vmem:[%s5 + $0xc0] sm:$0xff]
        %v1281 = vld [vmem:[%s5 + $0xc8] sm:$0xff]
        %v1282 = vld [vmem:[%s5 + $0xd0] sm:$0xff]
        %v1283 = vld [vmem:[%s5 + $0xd8] sm:$0xff]
        %v1284 = vld [vmem:[%s5 + $0xe0] sm:$0xff]
        %v1285 = vld [vmem:[%s5 + $0xe8] sm:$0xff]
        %v1286 = vld [vmem:[%s5 + $0xf0] sm:$0xff]
        %v1287 = vld [vmem:[%s5 + $0xf8] sm:$0xff]
        %v1288 = vld [vmem:[%s5 + $0x100] sm:$0xff]
        %v1289 = vld [vmem:[%s5 + $0x108] sm:$0xff]
        %v1290 = vld [vmem:[%s5 + $0x110] sm:$0xff]
        %v1291 = vld [vmem:[%s5 + $0x118] sm:$0xff]
        %v1292 = vld [vmem:[%s5 + $0x120] sm:$0xff]
        %v1293 = vld [vmem:[%s5 + $0x128] sm:$0xff]
        %v1294 = vld [vmem:[%s5 + $0x130] sm:$0xff]
        %v1295 = vld [vmem:[%s5 + $0x138] sm:$0xff]
        %v1296 = vld [vmem:[%s5 + $0x140] sm:$0xff]
        %v1297 = vld [vmem:[%s5 + $0x148] sm:$0xff]
        %v1298 = vld [vmem:[%s5 + $0x150] sm:$0xff]
        %v1299 = vld [vmem:[%s5 + $0x158] sm:$0xff]
        %v1300 = vld [vmem:[%s5 + $0x160] sm:$0xff]
        %v1301 = vld [vmem:[%s5 + $0x168] sm:$0xff]
        %v1302 = vld [vmem:[%s5 + $0x170] sm:$0xff]
        %v1303 = vld [vmem:[%s5 + $0x178] sm:$0xff]
        %v1304 = vld [vmem:[%s5 + $0x180] sm:$0xff]
        %v1305 = vld [vmem:[%s5 + $0x188] sm:$0xff]
        %v1306 = vld [vmem:[%s5 + $0x190] sm:$0xff]
        %v1307 = vld [vmem:[%s5 + $0x198] sm:$0xff]
        %v1308 = vld [vmem:[%s5 + $0x1a0] sm:$0xff]
        %v1309 = vld [vmem:[%s5 + $0x1a8] sm:$0xff]
        %v1310 = vld [vmem:[%s5 + $0x1b0] sm:$0xff]
        %v1311 = vld [vmem:[%s5 + $0x1b8] sm:$0xff]
        %v1312 = vld [vmem:[%s5 + $0x1c0] sm:$0xff]
        %v1313 = vld [vmem:[%s5 + $0x1c8] sm:$0xff]
        %v1314 = vld [vmem:[%s5 + $0x1d0] sm:$0xff]
        %v1315 = vld [vmem:[%s5 + $0x1d8] sm:$0xff]
        %v1316 = vld [vmem:[%s5 + $0x1e0] sm:$0xff]
        %v1317 = vld [vmem:[%s5 + $0x1e8] sm:$0xff]
        %v1318 = vld [vmem:[%s5 + $0x1f0] sm:$0xff]
        %v1319 = vld [vmem:[%s5 + $0x1f8] sm:$0xff]
        %v1320 = vld [vmem:[%s6] sm:$0x3]
        %v1322 = vlaneseq
        %v1323 = vshrl.u32 %v1322, 7
        %v1324 = vsub.s32 0, %v1323
        %v1325 = vrot.slane %v1320, %v1324
        %v1326 = vlaneseq
        %v1327 = vshrl.u32 %v1326, 7
        %v1328 = vsub.s32 1, %v1327
        %v1329 = vrot.slane %v1320, %v1328
        %v1396 = vunpack.c.l.b16 %v1256
        %v1397 = vunpack.c.h.b16 %v1256
        %v1398 = vunpack.c.l.b16 %v1257
        %v1399 = vunpack.c.h.b16 %v1257
        %v1400 = vunpack.c.l.b16 %v1258
        %v1401 = vunpack.c.h.b16 %v1258
        %v1402 = vunpack.c.l.b16 %v1259
        %v1403 = vunpack.c.h.b16 %v1259
        %v1404 = vunpack.c.l.b16 %v1260
        %v1405 = vunpack.c.h.b16 %v1260
        %v1406 = vunpack.c.l.b16 %v1261
        %v1407 = vunpack.c.h.b16 %v1261
        %v1408 = vunpack.c.l.b16 %v1262
        %v1409 = vunpack.c.h.b16 %v1262
        %v1410 = vunpack.c.l.b16 %v1263
        %v1411 = vunpack.c.h.b16 %v1263
        %v1412 = vunpack.c.l.b16 %v1264
        %v1413 = vunpack.c.h.b16 %v1264
        %v1414 = vunpack.c.l.b16 %v1265
        %v1415 = vunpack.c.h.b16 %v1265
        %v1416 = vunpack.c.l.b16 %v1266
        %v1417 = vunpack.c.h.b16 %v1266
        %v1418 = vunpack.c.l.b16 %v1267
        %v1419 = vunpack.c.h.b16 %v1267
        %v1420 = vunpack.c.l.b16 %v1268
        %v1421 = vunpack.c.h.b16 %v1268
        %v1422 = vunpack.c.l.b16 %v1269
        %v1423 = vunpack.c.h.b16 %v1269
        %v1424 = vunpack.c.l.b16 %v1270
        %v1425 = vunpack.c.h.b16 %v1270
        %v1426 = vunpack.c.l.b16 %v1271
        %v1427 = vunpack.c.h.b16 %v1271
        %v1428 = vunpack.c.l.b16 %v1272
        %v1429 = vunpack.c.h.b16 %v1272
        %v1430 = vunpack.c.l.b16 %v1273
        %v1431 = vunpack.c.h.b16 %v1273
        %v1432 = vunpack.c.l.b16 %v1274
        %v1433 = vunpack.c.h.b16 %v1274
        %v1434 = vunpack.c.l.b16 %v1275
        %v1435 = vunpack.c.h.b16 %v1275
        %v1436 = vunpack.c.l.b16 %v1276
        %v1437 = vunpack.c.h.b16 %v1276
        %v1438 = vunpack.c.l.b16 %v1277
        %v1439 = vunpack.c.h.b16 %v1277
        %v1440 = vunpack.c.l.b16 %v1278
        %v1441 = vunpack.c.h.b16 %v1278
        %v1442 = vunpack.c.l.b16 %v1279
        %v1443 = vunpack.c.h.b16 %v1279
        %v1444 = vunpack.c.l.b16 %v1280
        %v1445 = vunpack.c.h.b16 %v1280
        %v1446 = vunpack.c.l.b16 %v1281
        %v1447 = vunpack.c.h.b16 %v1281
        %v1448 = vunpack.c.l.b16 %v1282
        %v1449 = vunpack.c.h.b16 %v1282
        %v1450 = vunpack.c.l.b16 %v1283
        %v1451 = vunpack.c.h.b16 %v1283
        %v1452 = vunpack.c.l.b16 %v1284
        %v1453 = vunpack.c.h.b16 %v1284
        %v1454 = vunpack.c.l.b16 %v1285
        %v1455 = vunpack.c.h.b16 %v1285
        %v1456 = vunpack.c.l.b16 %v1286
        %v1457 = vunpack.c.h.b16 %v1286
        %v1458 = vunpack.c.l.b16 %v1287
        %v1459 = vunpack.c.h.b16 %v1287
        %v1460 = vunpack.c.l.b16 %v1288
        %v1461 = vunpack.c.h.b16 %v1288
        %v1462 = vunpack.c.l.b16 %v1289
        %v1463 = vunpack.c.h.b16 %v1289
        %v1464 = vunpack.c.l.b16 %v1290
        %v1465 = vunpack.c.h.b16 %v1290
        %v1466 = vunpack.c.l.b16 %v1291
        %v1467 = vunpack.c.h.b16 %v1291
        %v1468 = vunpack.c.l.b16 %v1292
        %v1469 = vunpack.c.h.b16 %v1292
        %v1470 = vunpack.c.l.b16 %v1293
        %v1471 = vunpack.c.h.b16 %v1293
        %v1472 = vunpack.c.l.b16 %v1294
        %v1473 = vunpack.c.h.b16 %v1294
        %v1474 = vunpack.c.l.b16 %v1295
        %v1475 = vunpack.c.h.b16 %v1295
        %v1476 = vunpack.c.l.b16 %v1296
        %v1477 = vunpack.c.h.b16 %v1296
        %v1478 = vunpack.c.l.b16 %v1297
        %v1479 = vunpack.c.h.b16 %v1297
        %v1480 = vunpack.c.l.b16 %v1298
        %v1481 = vunpack.c.h.b16 %v1298
        %v1482 = vunpack.c.l.b16 %v1299
        %v1483 = vunpack.c.h.b16 %v1299
        %v1484 = vunpack.c.l.b16 %v1300
        %v1485 = vunpack.c.h.b16 %v1300
        %v1486 = vunpack.c.l.b16 %v1301
        %v1487 = vunpack.c.h.b16 %v1301
        %v1488 = vunpack.c.l.b16 %v1302
        %v1489 = vunpack.c.h.b16 %v1302
        %v1490 = vunpack.c.l.b16 %v1303
        %v1491 = vunpack.c.h.b16 %v1303
        %v1492 = vunpack.c.l.b16 %v1304
        %v1493 = vunpack.c.h.b16 %v1304
        %v1494 = vunpack.c.l.b16 %v1305
        %v1495 = vunpack.c.h.b16 %v1305
        %v1496 = vunpack.c.l.b16 %v1306
        %v1497 = vunpack.c.h.b16 %v1306
        %v1498 = vunpack.c.l.b16 %v1307
        %v1499 = vunpack.c.h.b16 %v1307
        %v1500 = vunpack.c.l.b16 %v1308
        %v1501 = vunpack.c.h.b16 %v1308
        %v1502 = vunpack.c.l.b16 %v1309
        %v1503 = vunpack.c.h.b16 %v1309
        %v1504 = vunpack.c.l.b16 %v1310
        %v1505 = vunpack.c.h.b16 %v1310
        %v1506 = vunpack.c.l.b16 %v1311
        %v1507 = vunpack.c.h.b16 %v1311
        %v1508 = vunpack.c.l.b16 %v1312
        %v1509 = vunpack.c.h.b16 %v1312
        %v1510 = vunpack.c.l.b16 %v1313
        %v1511 = vunpack.c.h.b16 %v1313
        %v1512 = vunpack.c.l.b16 %v1314
        %v1513 = vunpack.c.h.b16 %v1314
        %v1514 = vunpack.c.l.b16 %v1315
        %v1515 = vunpack.c.h.b16 %v1315
        %v1516 = vunpack.c.l.b16 %v1316
        %v1517 = vunpack.c.h.b16 %v1316
        %v1518 = vunpack.c.l.b16 %v1317
        %v1519 = vunpack.c.h.b16 %v1317
        %v1520 = vunpack.c.l.b16 %v1318
        %v1521 = vunpack.c.h.b16 %v1318
        %v1522 = vunpack.c.l.b16 %v1319
        %v1523 = vunpack.c.h.b16 %v1319
        %v1524 = vpack.c.b16 %v1398, %v1396
        %v1525 = vpack.c.b16 %v1399, %v1397
        %v1526 = vpack.c.b16 %v1402, %v1400
        %v1527 = vpack.c.b16 %v1403, %v1401
        %v1528 = vpack.c.b16 %v1406, %v1404
        %v1529 = vpack.c.b16 %v1407, %v1405
        %v1530 = vpack.c.b16 %v1410, %v1408
        %v1531 = vpack.c.b16 %v1411, %v1409
        %v1532 = vpack.c.b16 %v1414, %v1412
        %v1533 = vpack.c.b16 %v1415, %v1413
        %v1534 = vpack.c.b16 %v1418, %v1416
        %v1535 = vpack.c.b16 %v1419, %v1417
        %v1536 = vpack.c.b16 %v1422, %v1420
        %v1537 = vpack.c.b16 %v1423, %v1421
        %v1538 = vpack.c.b16 %v1426, %v1424
        %v1539 = vpack.c.b16 %v1427, %v1425
        %v1540 = vpack.c.b16 %v1430, %v1428
        %v1541 = vpack.c.b16 %v1431, %v1429
        %v1542 = vpack.c.b16 %v1434, %v1432
        %v1543 = vpack.c.b16 %v1435, %v1433
        %v1544 = vpack.c.b16 %v1438, %v1436
        %v1545 = vpack.c.b16 %v1439, %v1437
        %v1546 = vpack.c.b16 %v1442, %v1440
        %v1547 = vpack.c.b16 %v1443, %v1441
        %v1548 = vpack.c.b16 %v1446, %v1444
        %v1549 = vpack.c.b16 %v1447, %v1445
        %v1550 = vpack.c.b16 %v1450, %v1448
        %v1551 = vpack.c.b16 %v1451, %v1449
        %v1552 = vpack.c.b16 %v1454, %v1452
        %v1553 = vpack.c.b16 %v1455, %v1453
        %v1554 = vpack.c.b16 %v1458, %v1456
        %v1555 = vpack.c.b16 %v1459, %v1457
        %v1556 = vpack.c.b16 %v1462, %v1460
        %v1557 = vpack.c.b16 %v1463, %v1461
        %v1558 = vpack.c.b16 %v1466, %v1464
        %v1559 = vpack.c.b16 %v1467, %v1465
        %v1560 = vpack.c.b16 %v1470, %v1468
        %v1561 = vpack.c.b16 %v1471, %v1469
        %v1562 = vpack.c.b16 %v1474, %v1472
        %v1563 = vpack.c.b16 %v1475, %v1473
        %v1564 = vpack.c.b16 %v1478, %v1476
        %v1565 = vpack.c.b16 %v1479, %v1477
        %v1566 = vpack.c.b16 %v1482, %v1480
        %v1567 = vpack.c.b16 %v1483, %v1481
        %v1568 = vpack.c.b16 %v1486, %v1484
        %v1569 = vpack.c.b16 %v1487, %v1485
        %v1570 = vpack.c.b16 %v1490, %v1488
        %v1571 = vpack.c.b16 %v1491, %v1489
        %v1572 = vpack.c.b16 %v1494, %v1492
        %v1573 = vpack.c.b16 %v1495, %v1493
        %v1574 = vpack.c.b16 %v1498, %v1496
        %v1575 = vpack.c.b16 %v1499, %v1497
        %v1576 = vpack.c.b16 %v1502, %v1500
        %v1577 = vpack.c.b16 %v1503, %v1501
        %v1578 = vpack.c.b16 %v1506, %v1504
        %v1579 = vpack.c.b16 %v1507, %v1505
        %v1580 = vpack.c.b16 %v1510, %v1508
        %v1581 = vpack.c.b16 %v1511, %v1509
        %v1582 = vpack.c.b16 %v1514, %v1512
        %v1583 = vpack.c.b16 %v1515, %v1513
        %v1584 = vpack.c.b16 %v1518, %v1516
        %v1585 = vpack.c.b16 %v1519, %v1517
        %v1586 = vpack.c.b16 %v1522, %v1520
        %v1587 = vpack.c.b16 %v1523, %v1521
        %1652 = vmatprep.subr.bf16.mxu0 %v1539
        %1653 = vmatpush1.bf16.msra.mxu0 %v1538
        %1654 = vmatprep.subr.bf16.mxu0 %v1537
        %1655 = vmatpush1.bf16.msra.mxu0 %v1536
        %1656 = vmatprep.subr.bf16.mxu0 %v1535
        %1657 = vmatpush1.bf16.msra.mxu0 %v1534
        %1658 = vmatprep.subr.bf16.mxu0 %v1533
        %1659 = vmatpush1.bf16.msra.mxu0 %v1532
        %1660 = vmatprep.subr.bf16.mxu0 %v1531
        %1661 = vmatpush1.bf16.msra.mxu0 %v1530
        %1662 = vmatprep.subr.bf16.mxu0 %v1529
        %1663 = vmatpush1.bf16.msra.mxu0 %v1528
        %1664 = vmatprep.subr.bf16.mxu0 %v1527
        %1665 = vmatpush1.bf16.msra.mxu0 %v1526
        %1666 = vmatprep.subr.bf16.mxu0 %v1525
        %1667 = vmatpush1.bf16.msra.mxu0 %v1524
        %1668 = vmatprep.subr.bf16.mxu0 %v1555
        %1669 = vmatpush2.bf16.msra.mxu0 %v1554
        %1670 = vmatprep.subr.bf16.mxu0 %v1553
        %1671 = vmatpush2.bf16.msra.mxu0 %v1552
        %1672 = vmatprep.subr.bf16.mxu0 %v1551
        %1673 = vmatpush2.bf16.msra.mxu0 %v1550
        %1674 = vmatprep.subr.bf16.mxu0 %v1549
        %1675 = vmatpush2.bf16.msra.mxu0 %v1548
        %1676 = vmatprep.subr.bf16.mxu0 %v1547
        %1677 = vmatpush2.bf16.msra.mxu0 %v1546
        %1678 = vmatprep.subr.bf16.mxu0 %v1545
        %1679 = vmatpush2.bf16.msra.mxu0 %v1544
        %1680 = vmatprep.subr.bf16.mxu0 %v1543
        %1681 = vmatpush2.bf16.msra.mxu0 %v1542
        %1682 = vmatprep.subr.bf16.mxu0 %v1541
        %1683 = vmatpush2.bf16.msra.mxu0 %v1540
        %1684 = vmatprep.mubr.bf16.mxu0 %v1253
        %1685 = vmatmul.mubr.bf16.gmra.mxu0 %v1252
        %v1686 = vpop.f32.mrf.mxu0
        %v1687 = vadd.f32 %v1325, %v1686
        %v1688 = vpop.f32.mrf.mxu0
        %v1689 = vadd.f32 %v1329, %v1688
        %v1690 = vpop.f32.mrf.mxu0
        %v1691 = vpop.f32.mrf.mxu0
        %1692 = vdwg.mxu0
        %1693 = vmatprep.subr.bf16.mxu0 %v1571
        %1694 = vmatpush1.bf16.msra.mxu0 %v1570
        %1695 = vmatprep.subr.bf16.mxu0 %v1569
        %1696 = vmatpush1.bf16.msra.mxu0 %v1568
        %1697 = vmatprep.subr.bf16.mxu0 %v1567
        %1698 = vmatpush1.bf16.msra.mxu0 %v1566
        %1699 = vmatprep.subr.bf16.mxu0 %v1565
        %1700 = vmatpush1.bf16.msra.mxu0 %v1564
        %1701 = vmatprep.subr.bf16.mxu0 %v1563
        %1702 = vmatpush1.bf16.msra.mxu0 %v1562
        %1703 = vmatprep.subr.bf16.mxu0 %v1561
        %1704 = vmatpush1.bf16.msra.mxu0 %v1560
        %1705 = vmatprep.subr.bf16.mxu0 %v1559
        %1706 = vmatpush1.bf16.msra.mxu0 %v1558
        %1707 = vmatprep.subr.bf16.mxu0 %v1557
        %1708 = vmatpush1.bf16.msra.mxu0 %v1556
        %1709 = vmatprep.subr.bf16.mxu0 %v1587
        %1710 = vmatpush2.bf16.msra.mxu0 %v1586
        %1711 = vmatprep.subr.bf16.mxu0 %v1585
        %1712 = vmatpush2.bf16.msra.mxu0 %v1584
        %1713 = vmatprep.subr.bf16.mxu0 %v1583
        %1714 = vmatpush2.bf16.msra.mxu0 %v1582
        %1715 = vmatprep.subr.bf16.mxu0 %v1581
        %1716 = vmatpush2.bf16.msra.mxu0 %v1580
        %1717 = vmatprep.subr.bf16.mxu0 %v1579
        %1718 = vmatpush2.bf16.msra.mxu0 %v1578
        %1719 = vmatprep.subr.bf16.mxu0 %v1577
        %1720 = vmatpush2.bf16.msra.mxu0 %v1576
        %1721 = vmatprep.subr.bf16.mxu0 %v1575
        %1722 = vmatpush2.bf16.msra.mxu0 %v1574
        %1723 = vmatprep.subr.bf16.mxu0 %v1573
        %1724 = vmatpush2.bf16.msra.mxu0 %v1572
        %1725 = vmatprep.mubr.bf16.mxu0 %v1255
        %1726 = vmatmul.mubr.bf16.gmra.mxu0 %v1254
        %v1727 = vpop.f32.mrf.mxu0
        %v1728 = vadd.f32 %v1687, %v1727
        %v1729 = vpop.f32.mrf.mxu0
        %v1730 = vadd.f32 %v1689, %v1729
        %v1731 = vpop.f32.mrf.mxu0
        %v1732 = vpop.f32.mrf.mxu0
        %1733 = vdwg.mxu0
        %v1734 = vmax.f32 %v1728, 0.0
        %v1735 = vmax.f32 %v1730, 0.0
        %1736 = vst [vmem:[%s272] sm:$0xff] %v1734
        %1737 = vst [vmem:[%s272 + $0x8] sm:$0xff] %v1735
        %s1738 = sand.u32 %s181, 1
        %s1739 = scalar_lea.sflag [#allocation3], %s1738
        %s1740 = sand.u32 %s181, 1
        %s1741 = smul.addr %s1740, 16
        %s1742 = scalar_lea.vmem [#allocation2], %s1741
        // Predicated region
        $region49: #{dummy_wav2vec2_forward.1} parent=47 // pred_check
          %p1743 = pneg %p191
        $region50: #{dummy_wav2vec2_forward.1} parent=47 // pred_check_branch
          %1745 = sbr.rel (%p1743) target = $region52
        $region51: #{dummy_wav2vec2_forward.1} parent=47 // pred_region
          %s1747 = ssub.s32 256, 256
          %1748 = vsyncadd %s1739, %s1747
          %s1749 = smul.addr %s21, 2
          %s1750 = smul.addr %s1749, 128
          %s1751 = scalar_lea.hbm %s7, %s1750
          %s1753 = sshll.u32 %s1742, 4
          %s1754 = int_to_ptr.vmem [resolvable:$true] %s1753
          %1756 = dma.vmem_to_hbm [thread:$0]  %s1754, 256, %s1751, %s1739
        $region52: #{dummy_wav2vec2_forward.1} parent=47 // pred_fallthru
          _
      $region48: #{dummy_wav2vec2_forward.1} parent=5 // pred_fallthru
        _
      %p1757 = scmp.le.s32.totalorder 2, %s16
      // Predicated region
      $region53: #{dummy_wav2vec2_forward.1} parent=5 // pred_check
        %p1758 = pneg %p1757
      $region54: #{dummy_wav2vec2_forward.1} parent=5 // pred_check_branch
        %1760 = sbr.rel (%p1758) target = $region56
      $region55: #{dummy_wav2vec2_forward.1} parent=5 // pred_region
        %s1761 = ssub.s32 %s16, 2
        // Predicated region
        $region57: #{dummy_wav2vec2_forward.1} parent=55 // pred_check
          %p1762 = pneg %p197
        $region58: #{dummy_wav2vec2_forward.1} parent=55 // pred_check_branch
          %1764 = sbr.rel (%p1762) target = $region60
        $region59: #{dummy_wav2vec2_forward.1} parent=55 // pred_region
          %s1765 = sand.u32 %s182, 1
          %s1766 = scalar_lea.sflag [#allocation3], %s1765
          %s1767 = sand.u32 %s182, 1
          %s1768 = smul.addr %s1767, 16
          %s1769 = scalar_lea.vmem [#allocation2], %s1768
          %1770 = dma.done %s1766, 256
        $region60: #{dummy_wav2vec2_forward.1} parent=55 // pred_fallthru
          _
      $region56: #{dummy_wav2vec2_forward.1} parent=5 // pred_fallthru
        _
    $region6: #{dummy_wav2vec2_forward.1} parent=1 // loop_footer
      %s20 = sadd.s32 1, %s16
    $region7: #{dummy_wav2vec2_forward.1} parent=1 // loop_footer_branch
      %15 = sbr.rel target = $region3
    $region8: #{dummy_wav2vec2_forward.1} parent=1 // loop_exit
      _
    %1771 = vsyncpa [#allocation3], 1
    %s1772 = scalar_lea.sflag [#allocation3], 1
    %1773 = vsyncpa %s1772, 1

</llo_original>
